<compile_context>
chip_gen: v7x
topology: tpu7x:2x2x1
jax: 0.10.0
libtpu: 0.0.40
codegen_flags: <defaults>
</compile_context>

<pallas_src>
import functools

import jax
import jax.numpy as jnp
from jax.experimental import pallas as pl
from jax.experimental.pallas import tpu as pltpu

_LN_EPS = 1e-5        # PyTorch nn.LayerNorm default eps
_POS_WEIGHT = 20.0    # self.posi_weight


def _vmem():
    return pl.BlockSpec(memory_space=pltpu.MemorySpace.VMEM)


def _layernorm(x, gamma, beta):
    mu = jnp.mean(x, axis=-1, keepdims=True)
    var = jnp.mean((x - mu) ** 2, axis=-1, keepdims=True)
    return (x - mu) * jax.lax.rsqrt(var + _LN_EPS) * gamma + beta


# ----------------------------------------------------------------------------
# Fused hetenet forward over all L blocks: grid=(L,), one block per grid step.
# Per block: 3x (Linear -> LayerNorm -> ReLU -> interactor @ x), then fixed
# weighted sum of the three hidden states.
# ----------------------------------------------------------------------------
def hetenet_stack_kernel(wf_ref, im_ref, feat_ref,
                         w11_ref, b11_ref, g11_ref, be11_ref,
                         w12_ref, b12_ref, g12_ref, be12_ref,
                         w13_ref, b13_ref, g13_ref, be13_ref,
                         out_ref):
    l = pl.program_id(0)
    im = im_ref[...]                                    # (N, N)

    x = jnp.dot(feat_ref[...], w11_ref[...], preferred_element_type=jnp.float32) + b11_ref[...]
    x = jnp.maximum(_layernorm(x, g11_ref[...], be11_ref[...]), 0.0)
    h11 = jnp.dot(im, x, preferred_element_type=jnp.float32)

    x = jnp.dot(h11, w12_ref[...], preferred_element_type=jnp.float32) + b12_ref[...]
    x = jnp.maximum(_layernorm(x, g12_ref[...], be12_ref[...]), 0.0)
    h12 = jnp.dot(im, x, preferred_element_type=jnp.float32)

    x = jnp.dot(h12, w13_ref[...], preferred_element_type=jnp.float32) + b13_ref[...]
    x = jnp.maximum(_layernorm(x, g13_ref[...], be13_ref[...]), 0.0)
    h13 = jnp.dot(im, x, preferred_element_type=jnp.float32)

    out_ref[...] = wf_ref[l, 0] * h11 + wf_ref[l, 1] * h12 + wf_ref[l, 2] * h13


def hetenet_forward_stacked(inm_stack, feat_stack, p):
    L, N, _ = inm_stack.shape
    D = p["w11"].shape[-1]

    def _blk3(d1, d2):
        # leading L dim is squeezed; last two dims cover the full array extent.
        return pl.BlockSpec((None, d1, d2), lambda l: (l, 0, 0))

    in_specs = [
        pl.BlockSpec(memory_space=pltpu.MemorySpace.SMEM),   # weight_final (L, 3)
        _blk3(N, N), _blk3(N, N),                            # interactor, features
        _blk3(N, D), _blk3(1, D), _blk3(1, D), _blk3(1, D),  # layer 11
        _blk3(D, D), _blk3(1, D), _blk3(1, D), _blk3(1, D),  # layer 12
        _blk3(D, D), _blk3(1, D), _blk3(1, D), _blk3(1, D),  # layer 13
    ]
    return pl.pallas_call(
        hetenet_stack_kernel,
        grid=(L,),
        out_shape=jax.ShapeDtypeStruct((L, N, D), jnp.float32),
        in_specs=in_specs,
        out_specs=pl.BlockSpec((None, N, D), lambda l: (l, 0, 0)),
        compiler_params=pltpu.CompilerParams(
            dimension_semantics=("parallel",),
            vmem_limit_bytes=64 << 20),
    )(p["weight_final"], inm_stack, feat_stack,
      p["w11"], p["b11"], p["g11"], p["be11"],
      p["w12"], p["b12"], p["g12"], p["be12"],
      p["w13"], p["b13"], p["g13"], p["be13"])


# ----------------------------------------------------------------------------
# Fused: drug-index gather + both fusion MLPs + scores + sigmoid + BCE loss.
# info_ref is the concatenated-embedding layout (N, L*D) (lane-dense, L*D=128).
# ----------------------------------------------------------------------------
def fusion_scores_loss_kernel(didx_ref, info_ref,
                              dw1_ref, db1_ref, dw2_ref, db2_ref,
                              sw1_ref, sb1_ref, sw2_ref, sb2_ref,
                              lab_ref, probs_ref, loss_ref,
                              *, drug_num, num_layers):
    B = lab_ref.shape[0]

    # Row gather as one-hot matmul (no dynamic gather needed).
    idx = didx_ref[...]                                            # (B, 1) int32
    iota = jax.lax.broadcasted_iota(jnp.int32, (B, drug_num), 1)
    onehot = (iota == idx).astype(jnp.float32)                     # (B, drug_num)
    obj_info = info_ref[:drug_num, :]                              # (drug_num, L*D)
    drug_cat = jnp.dot(onehot, obj_info, preferred_element_type=jnp.float32)   # (B, L*D)
    side_cat = info_ref[drug_num:, :]                              # (S, L*D)

    # Contract last dims of both operands == A @ B.T without an explicit transpose.
    dn_rt = (((1,), (1,)), ((), ()))

    # sum_l drug_l @ side_l.T  ==  drug_cat @ side_cat.T   (single K=L*D matmul)
    scores_avg = jax.lax.dot_general(
        drug_cat, side_cat, dn_rt, preferred_element_type=jnp.float32) / float(num_layers)

    # Fusion MLPs: Linear -> ReLU -> Dropout(identity) -> Linear
    dh = jnp.maximum(
        jnp.dot(drug_cat, dw1_ref[...], preferred_element_type=jnp.float32) + db1_ref[...], 0.0)
    drug_tot = jnp.dot(dh, dw2_ref[...], preferred_element_type=jnp.float32) + db2_ref[...]
    sh = jnp.maximum(
        jnp.dot(side_cat, sw1_ref[...], preferred_element_type=jnp.float32) + sb1_ref[...], 0.0)
    side_tot = jnp.dot(sh, sw2_ref[...], preferred_element_type=jnp.float32) + sb2_ref[...]

    scores_cat = jax.lax.dot_general(
        drug_tot, side_tot, dn_rt, preferred_element_type=jnp.float32)
    x = (scores_avg + scores_cat) * 0.5

    # Numerically stable sigmoid / BCEWithLogits(pos_weight).
    y = lab_ref[...]
    sp_pos = jnp.maximum(x, 0.0) + jnp.log1p(jnp.exp(-jnp.abs(x)))   # softplus(x)
    sp_neg = sp_pos - x                                              # softplus(-x)
    probs_ref[...] = jnp.exp(-sp_neg)                                # sigmoid(x)
    loss = jnp.mean(_POS_WEIGHT * y * sp_neg + (1.0 - y) * sp_pos)
    loss_ref[...] = jnp.reshape(loss, (1, 1))


# ----------------------------------------------------------------------------
# Full myModel training-path forward
# ----------------------------------------------------------------------------
def my_model_forward(params, inm_stack, feat_stack, drug_index, true_label, *, drug_num):
    L, N, _ = inm_stack.shape
    D = params["hete"]["w11"].shape[-1]

    info_stack = hetenet_forward_stacked(inm_stack, feat_stack, params["hete"])   # (L, N, D)
    # Tiny layout change so concatenated embeddings are lane-dense (L*D = 128):
    # info_cat[n, l*D + d] == info_stack[l, n, d]  (matches torch.cat(dim=1) order)
    info_cat = jnp.transpose(info_stack, (1, 0, 2)).reshape(N, L * D)

    B = drug_index.shape[0]
    S = N - drug_num
    labels2d = true_label.reshape(B, S)
    didx2d = drug_index.reshape(B, 1).astype(jnp.int32)

    dp, sp = params["drug_fusion"], params["side_fusion"]
    probs2d, loss = pl.pallas_call(
        functools.partial(fusion_scores_loss_kernel, drug_num=drug_num, num_layers=L),
        out_shape=(jax.ShapeDtypeStruct((B, S), jnp.float32),
                   jax.ShapeDtypeStruct((1, 1), jnp.float32)),
        in_specs=[_vmem()] * 11,
        out_specs=(_vmem(), _vmem()),
    )(didx2d, info_cat, dp["w1"], dp["b1"], dp["w2"], dp["b2"],
      sp["w1"], sp["b1"], sp["w2"], sp["b2"], labels2d)

    return probs2d.reshape(-1), loss[0, 0]


# ----------------------------------------------------------------------------
# Deterministic parameter init (synthetic; shapes from the module __init__),
# stacked over the L hetenet blocks.
# ----------------------------------------------------------------------------
def _linear_init_stacked(key, L, din, dout):
    kw, kb = jax.random.split(key)
    bound = 1.0 / (din ** 0.5)
    w = jax.random.uniform(kw, (L, din, dout), jnp.float32, -bound, bound)
    b = jax.random.uniform(kb, (L, 1, dout), jnp.float32, -bound, bound)
    return w, b


def _linear_init(key, din, dout):
    kw, kb = jax.random.split(key)
    bound = 1.0 / (din ** 0.5)
    w = jax.random.uniform(kw, (din, dout), jnp.float32, -bound, bound)
    b = jax.random.uniform(kb, (1, dout), jnp.float32, -bound, bound)
    return w, b


def init_hetenet_params_stacked(key, L, n_in, d):
    k1, k2, k3 = jax.random.split(key, 3)
    w11, b11 = _linear_init_stacked(k1, L, n_in, d)
    w12, b12 = _linear_init_stacked(k2, L, d, d)
    w13, b13 = _linear_init_stacked(k3, L, d, d)
    ones = jnp.ones((L, 1, d), jnp.float32)
    zeros = jnp.zeros((L, 1, d), jnp.float32)
    wf = jnp.tile(jnp.array([[0.5, 0.33, 0.25]], jnp.float32), (L, 1))
    return dict(weight_final=wf,
                w11=w11, b11=b11, g11=ones, be11=zeros,
                w12=w12, b12=b12, g12=ones, be12=zeros,
                w13=w13, b13=b13, g13=ones, be13=zeros)


def init_fusion_params(key, din, d):
    k1, k2 = jax.random.split(key)
    w1, b1 = _linear_init(k1, din, d)
    w2, b2 = _linear_init(k2, d, d)
    return dict(w1=w1, b1=b1, w2=w2, b2=b2)


if __name__ == "__main__":
    # Small shapes consistent with the module:
    drug_num, side_num, emd_dim = 8, 8, 32
    drug_feats, side_feats = 2, 2
    L = drug_feats * side_feats                # hete_layers
    N = drug_num + side_num                    # hetenet input_dim == N

    key = jax.random.PRNGKey(0)
    k_params, k_data = jax.random.split(key)

    pk = jax.random.split(k_params, 3)
    params = {
        "hete": init_hetenet_params_stacked(pk[0], L, N, emd_dim),
        "drug_fusion": init_fusion_params(pk[1], emd_dim * L, emd_dim),
        "side_fusion": init_fusion_params(pk[2], emd_dim * L, emd_dim),
    }

    dk = jax.random.split(k_data, 3)
    inm_stack = jax.random.uniform(dk[0], (L, N, N), jnp.float32)
    feat_stack = jax.random.normal(dk[1], (L, N, N), jnp.float32)
    drug_index = jnp.array([0, 2, 5, 7], dtype=jnp.int32)   # training-mode batch of drug ids
    batch = drug_index.shape[0]
    true_label = (jax.random.uniform(dk[2], (batch * side_num,)) > 0.5).astype(jnp.float32)

    fwd = jax.jit(functools.partial(my_model_forward, drug_num=drug_num))
    probs, loss = fwd(params, inm_stack, feat_stack, drug_index, true_label)
    jax.block_until_ready((probs, loss))

    assert probs.shape == (batch * side_num,)
    assert loss.shape == ()
    assert bool(jnp.all(jnp.isfinite(probs))) and bool(jnp.isfinite(loss))
    print("KERNEL_OK")
</pallas_src>

<mosaic_0001>
module attributes {stable_mosaic.version = 11 : i64} {
  func.func @hetenet_stack_kernel(%arg0: i32, %arg1: memref<4x3xf32, #tpu.memory_space<smem>>, %arg2: memref<1x16x16xf32, #tpu.memory_space<vmem>>, %arg3: memref<1x16x16xf32, #tpu.memory_space<vmem>>, %arg4: memref<1x16x32xf32, #tpu.memory_space<vmem>>, %arg5: memref<1x1x32xf32, #tpu.memory_space<vmem>>, %arg6: memref<1x1x32xf32, #tpu.memory_space<vmem>>, %arg7: memref<1x1x32xf32, #tpu.memory_space<vmem>>, %arg8: memref<1x32x32xf32, #tpu.memory_space<vmem>>, %arg9: memref<1x1x32xf32, #tpu.memory_space<vmem>>, %arg10: memref<1x1x32xf32, #tpu.memory_space<vmem>>, %arg11: memref<1x1x32xf32, #tpu.memory_space<vmem>>, %arg12: memref<1x32x32xf32, #tpu.memory_space<vmem>>, %arg13: memref<1x1x32xf32, #tpu.memory_space<vmem>>, %arg14: memref<1x1x32xf32, #tpu.memory_space<vmem>>, %arg15: memref<1x1x32xf32, #tpu.memory_space<vmem>>, %arg16: memref<1x16x32xf32, #tpu.memory_space<vmem>>) attributes {dimension_semantics = [#tpu.dimension_semantics<parallel>], iteration_bounds = array<i64: 4>, scalar_prefetch = 0 : i64, scratch_operands = 0 : i64, tpu.core_type = #tpu.core_type<tc>, window_params = [{transform_indices = @transform_0, window_bounds = array<i64: 4, 3>}, {transform_indices = @transform_1, window_bounds = array<i64: 1, 16, 16>}, {transform_indices = @transform_2, window_bounds = array<i64: 1, 16, 16>}, {transform_indices = @transform_3, window_bounds = array<i64: 1, 16, 32>}, {transform_indices = @transform_4, window_bounds = array<i64: 1, 1, 32>}, {transform_indices = @transform_5, window_bounds = array<i64: 1, 1, 32>}, {transform_indices = @transform_6, window_bounds = array<i64: 1, 1, 32>}, {transform_indices = @transform_7, window_bounds = array<i64: 1, 32, 32>}, {transform_indices = @transform_8, window_bounds = array<i64: 1, 1, 32>}, {transform_indices = @transform_9, window_bounds = array<i64: 1, 1, 32>}, {transform_indices = @transform_10, window_bounds = array<i64: 1, 1, 32>}, {transform_indices = @transform_11, window_bounds = array<i64: 1, 32, 32>}, {transform_indices = @transform_12, window_bounds = array<i64: 1, 1, 32>}, {transform_indices = @transform_13, window_bounds = array<i64: 1, 1, 32>}, {transform_indices = @transform_14, window_bounds = array<i64: 1, 1, 32>}, {transform_indices = @transform_15, window_bounds = array<i64: 1, 16, 32>}]} {
    %c0 = arith.constant 0 : index
    %c0_0 = arith.constant 0 : index
    %c0_1 = arith.constant 0 : index
    %0 = vector.load %arg2[%c0, %c0_0, %c0_1] : memref<1x16x16xf32, #tpu.memory_space<vmem>>, vector<1x16x16xf32>
    %1 = vector.shape_cast %0 : vector<1x16x16xf32> to vector<16x16xf32>
    %c0_2 = arith.constant 0 : index
    %c0_3 = arith.constant 0 : index
    %c0_4 = arith.constant 0 : index
    %2 = vector.load %arg3[%c0_2, %c0_3, %c0_4] : memref<1x16x16xf32, #tpu.memory_space<vmem>>, vector<1x16x16xf32>
    %3 = vector.shape_cast %2 : vector<1x16x16xf32> to vector<16x16xf32>
    %c0_5 = arith.constant 0 : index
    %c0_6 = arith.constant 0 : index
    %c0_7 = arith.constant 0 : index
    %4 = vector.load %arg4[%c0_5, %c0_6, %c0_7] : memref<1x16x32xf32, #tpu.memory_space<vmem>>, vector<1x16x32xf32>
    %5 = vector.shape_cast %4 : vector<1x16x32xf32> to vector<16x32xf32>
    %cst = arith.constant dense<0.000000e+00> : vector<16x32xf32>
    %6 = tpu.matmul %3, %5, %cst {dimension_numbers = #tpu.dot_dimension_numbers<[1], [0], [0], [1], [0, 0, 1, 1], [], []>} : vector<16x16xf32>, vector<16x32xf32>, vector<16x32xf32> -> vector<16x32xf32>
    %c0_8 = arith.constant 0 : index
    %c0_9 = arith.constant 0 : index
    %c0_10 = arith.constant 0 : index
    %7 = vector.load %arg5[%c0_8, %c0_9, %c0_10] : memref<1x1x32xf32, #tpu.memory_space<vmem>>, vector<1x1x32xf32>
    %8 = vector.shape_cast %7 : vector<1x1x32xf32> to vector<1x32xf32>
    %9 = vector.broadcast %8 : vector<1x32xf32> to vector<16x32xf32>
    %10 = arith.addf %6, %9 : vector<16x32xf32>
    %c0_11 = arith.constant 0 : index
    %c0_12 = arith.constant 0 : index
    %c0_13 = arith.constant 0 : index
    %11 = vector.load %arg6[%c0_11, %c0_12, %c0_13] : memref<1x1x32xf32, #tpu.memory_space<vmem>>, vector<1x1x32xf32>
    %12 = vector.shape_cast %11 : vector<1x1x32xf32> to vector<1x32xf32>
    %c0_14 = arith.constant 0 : index
    %c0_15 = arith.constant 0 : index
    %c0_16 = arith.constant 0 : index
    %13 = vector.load %arg7[%c0_14, %c0_15, %c0_16] : memref<1x1x32xf32, #tpu.memory_space<vmem>>, vector<1x1x32xf32>
    %14 = vector.shape_cast %13 : vector<1x1x32xf32> to vector<1x32xf32>
    %cst_17 = arith.constant dense<0.000000e+00> : vector<16xf32>
    %15 = vector.multi_reduction <add>, %10, %cst_17 [1] : vector<16x32xf32> to vector<16xf32>
    %16 = vector.shape_cast %15 : vector<16xf32> to vector<16x1xf32>
    %cst_18 = arith.constant 3.200000e+01 : f32
    %17 = vector.broadcast %cst_18 : f32 to vector<16x1xf32>
    %18 = arith.divf %16, %17 : vector<16x1xf32>
    %19 = vector.broadcast %18 : vector<16x1xf32> to vector<16x32xf32>
    %20 = arith.subf %10, %19 : vector<16x32xf32>
    %21 = arith.mulf %20, %20 : vector<16x32xf32>
    %cst_19 = arith.constant dense<0.000000e+00> : vector<16xf32>
    %22 = vector.multi_reduction <add>, %21, %cst_19 [1] : vector<16x32xf32> to vector<16xf32>
    %23 = vector.shape_cast %22 : vector<16xf32> to vector<16x1xf32>
    %cst_20 = arith.constant 3.200000e+01 : f32
    %24 = vector.broadcast %cst_20 : f32 to vector<16x1xf32>
    %25 = arith.divf %23, %24 : vector<16x1xf32>
    %26 = vector.broadcast %18 : vector<16x1xf32> to vector<16x32xf32>
    %27 = arith.subf %10, %26 : vector<16x32xf32>
    %cst_21 = arith.constant 9.99999974E-6 : f32
    %28 = vector.broadcast %cst_21 : f32 to vector<16x1xf32>
    %29 = arith.addf %25, %28 : vector<16x1xf32>
    %30 = math.rsqrt %29 : vector<16x1xf32>
    %31 = vector.broadcast %30 : vector<16x1xf32> to vector<16x32xf32>
    %32 = arith.mulf %27, %31 : vector<16x32xf32>
    %33 = vector.broadcast %12 : vector<1x32xf32> to vector<16x32xf32>
    %34 = arith.mulf %32, %33 : vector<16x32xf32>
    %35 = vector.broadcast %14 : vector<1x32xf32> to vector<16x32xf32>
    %36 = arith.addf %34, %35 : vector<16x32xf32>
    %cst_22 = arith.constant 0.000000e+00 : f32
    %37 = vector.broadcast %cst_22 : f32 to vector<16x32xf32>
    %38 = arith.maximumf %36, %37 : vector<16x32xf32>
    %cst_23 = arith.constant dense<0.000000e+00> : vector<16x32xf32>
    %39 = tpu.matmul %1, %38, %cst_23 {dimension_numbers = #tpu.dot_dimension_numbers<[1], [0], [0], [1], [0, 0, 1, 1], [], []>} : vector<16x16xf32>, vector<16x32xf32>, vector<16x32xf32> -> vector<16x32xf32>
    %c0_24 = arith.constant 0 : index
    %c0_25 = arith.constant 0 : index
    %c0_26 = arith.constant 0 : index
    %40 = vector.load %arg8[%c0_24, %c0_25, %c0_26] : memref<1x32x32xf32, #tpu.memory_space<vmem>>, vector<1x32x32xf32>
    %41 = vector.shape_cast %40 : vector<1x32x32xf32> to vector<32x32xf32>
    %cst_27 = arith.constant dense<0.000000e+00> : vector<16x32xf32>
    %42 = tpu.matmul %39, %41, %cst_27 {dimension_numbers = #tpu.dot_dimension_numbers<[1], [0], [0], [1], [0, 0, 1, 1], [], []>} : vector<16x32xf32>, vector<32x32xf32>, vector<16x32xf32> -> vector<16x32xf32>
    %c0_28 = arith.constant 0 : index
    %c0_29 = arith.constant 0 : index
    %c0_30 = arith.constant 0 : index
    %43 = vector.load %arg9[%c0_28, %c0_29, %c0_30] : memref<1x1x32xf32, #tpu.memory_space<vmem>>, vector<1x1x32xf32>
    %44 = vector.shape_cast %43 : vector<1x1x32xf32> to vector<1x32xf32>
    %45 = vector.broadcast %44 : vector<1x32xf32> to vector<16x32xf32>
    %46 = arith.addf %42, %45 : vector<16x32xf32>
    %c0_31 = arith.constant 0 : index
    %c0_32 = arith.constant 0 : index
    %c0_33 = arith.constant 0 : index
    %47 = vector.load %arg10[%c0_31, %c0_32, %c0_33] : memref<1x1x32xf32, #tpu.memory_space<vmem>>, vector<1x1x32xf32>
    %48 = vector.shape_cast %47 : vector<1x1x32xf32> to vector<1x32xf32>
    %c0_34 = arith.constant 0 : index
    %c0_35 = arith.constant 0 : index
    %c0_36 = arith.constant 0 : index
    %49 = vector.load %arg11[%c0_34, %c0_35, %c0_36] : memref<1x1x32xf32, #tpu.memory_space<vmem>>, vector<1x1x32xf32>
    %50 = vector.shape_cast %49 : vector<1x1x32xf32> to vector<1x32xf32>
    %cst_37 = arith.constant dense<0.000000e+00> : vector<16xf32>
    %51 = vector.multi_reduction <add>, %46, %cst_37 [1] : vector<16x32xf32> to vector<16xf32>
    %52 = vector.shape_cast %51 : vector<16xf32> to vector<16x1xf32>
    %cst_38 = arith.constant 3.200000e+01 : f32
    %53 = vector.broadcast %cst_38 : f32 to vector<16x1xf32>
    %54 = arith.divf %52, %53 : vector<16x1xf32>
    %55 = vector.broadcast %54 : vector<16x1xf32> to vector<16x32xf32>
    %56 = arith.subf %46, %55 : vector<16x32xf32>
    %57 = arith.mulf %56, %56 : vector<16x32xf32>
    %cst_39 = arith.constant dense<0.000000e+00> : vector<16xf32>
    %58 = vector.multi_reduction <add>, %57, %cst_39 [1] : vector<16x32xf32> to vector<16xf32>
    %59 = vector.shape_cast %58 : vector<16xf32> to vector<16x1xf32>
    %cst_40 = arith.constant 3.200000e+01 : f32
    %60 = vector.broadcast %cst_40 : f32 to vector<16x1xf32>
    %61 = arith.divf %59, %60 : vector<16x1xf32>
    %62 = vector.broadcast %54 : vector<16x1xf32> to vector<16x32xf32>
    %63 = arith.subf %46, %62 : vector<16x32xf32>
    %cst_41 = arith.constant 9.99999974E-6 : f32
    %64 = vector.broadcast %cst_41 : f32 to vector<16x1xf32>
    %65 = arith.addf %61, %64 : vector<16x1xf32>
    %66 = math.rsqrt %65 : vector<16x1xf32>
    %67 = vector.broadcast %66 : vector<16x1xf32> to vector<16x32xf32>
    %68 = arith.mulf %63, %67 : vector<16x32xf32>
    %69 = vector.broadcast %48 : vector<1x32xf32> to vector<16x32xf32>
    %70 = arith.mulf %68, %69 : vector<16x32xf32>
    %71 = vector.broadcast %50 : vector<1x32xf32> to vector<16x32xf32>
    %72 = arith.addf %70, %71 : vector<16x32xf32>
    %cst_42 = arith.constant 0.000000e+00 : f32
    %73 = vector.broadcast %cst_42 : f32 to vector<16x32xf32>
    %74 = arith.maximumf %72, %73 : vector<16x32xf32>
    %cst_43 = arith.constant dense<0.000000e+00> : vector<16x32xf32>
    %75 = tpu.matmul %1, %74, %cst_43 {dimension_numbers = #tpu.dot_dimension_numbers<[1], [0], [0], [1], [0, 0, 1, 1], [], []>} : vector<16x16xf32>, vector<16x32xf32>, vector<16x32xf32> -> vector<16x32xf32>
    %c0_44 = arith.constant 0 : index
    %c0_45 = arith.constant 0 : index
    %c0_46 = arith.constant 0 : index
    %76 = vector.load %arg12[%c0_44, %c0_45, %c0_46] : memref<1x32x32xf32, #tpu.memory_space<vmem>>, vector<1x32x32xf32>
    %77 = vector.shape_cast %76 : vector<1x32x32xf32> to vector<32x32xf32>
    %cst_47 = arith.constant dense<0.000000e+00> : vector<16x32xf32>
    %78 = tpu.matmul %75, %77, %cst_47 {dimension_numbers = #tpu.dot_dimension_numbers<[1], [0], [0], [1], [0, 0, 1, 1], [], []>} : vector<16x32xf32>, vector<32x32xf32>, vector<16x32xf32> -> vector<16x32xf32>
    %c0_48 = arith.constant 0 : index
    %c0_49 = arith.constant 0 : index
    %c0_50 = arith.constant 0 : index
    %79 = vector.load %arg13[%c0_48, %c0_49, %c0_50] : memref<1x1x32xf32, #tpu.memory_space<vmem>>, vector<1x1x32xf32>
    %80 = vector.shape_cast %79 : vector<1x1x32xf32> to vector<1x32xf32>
    %81 = vector.broadcast %80 : vector<1x32xf32> to vector<16x32xf32>
    %82 = arith.addf %78, %81 : vector<16x32xf32>
    %c0_51 = arith.constant 0 : index
    %c0_52 = arith.constant 0 : index
    %c0_53 = arith.constant 0 : index
    %83 = vector.load %arg14[%c0_51, %c0_52, %c0_53] : memref<1x1x32xf32, #tpu.memory_space<vmem>>, vector<1x1x32xf32>
    %84 = vector.shape_cast %83 : vector<1x1x32xf32> to vector<1x32xf32>
    %c0_54 = arith.constant 0 : index
    %c0_55 = arith.constant 0 : index
    %c0_56 = arith.constant 0 : index
    %85 = vector.load %arg15[%c0_54, %c0_55, %c0_56] : memref<1x1x32xf32, #tpu.memory_space<vmem>>, vector<1x1x32xf32>
    %86 = vector.shape_cast %85 : vector<1x1x32xf32> to vector<1x32xf32>
    %cst_57 = arith.constant dense<0.000000e+00> : vector<16xf32>
    %87 = vector.multi_reduction <add>, %82, %cst_57 [1] : vector<16x32xf32> to vector<16xf32>
    %88 = vector.shape_cast %87 : vector<16xf32> to vector<16x1xf32>
    %cst_58 = arith.constant 3.200000e+01 : f32
    %89 = vector.broadcast %cst_58 : f32 to vector<16x1xf32>
    %90 = arith.divf %88, %89 : vector<16x1xf32>
    %91 = vector.broadcast %90 : vector<16x1xf32> to vector<16x32xf32>
    %92 = arith.subf %82, %91 : vector<16x32xf32>
    %93 = arith.mulf %92, %92 : vector<16x32xf32>
    %cst_59 = arith.constant dense<0.000000e+00> : vector<16xf32>
    %94 = vector.multi_reduction <add>, %93, %cst_59 [1] : vector<16x32xf32> to vector<16xf32>
    %95 = vector.shape_cast %94 : vector<16xf32> to vector<16x1xf32>
    %cst_60 = arith.constant 3.200000e+01 : f32
    %96 = vector.broadcast %cst_60 : f32 to vector<16x1xf32>
    %97 = arith.divf %95, %96 : vector<16x1xf32>
    %98 = vector.broadcast %90 : vector<16x1xf32> to vector<16x32xf32>
    %99 = arith.subf %82, %98 : vector<16x32xf32>
    %cst_61 = arith.constant 9.99999974E-6 : f32
    %100 = vector.broadcast %cst_61 : f32 to vector<16x1xf32>
    %101 = arith.addf %97, %100 : vector<16x1xf32>
    %102 = math.rsqrt %101 : vector<16x1xf32>
    %103 = vector.broadcast %102 : vector<16x1xf32> to vector<16x32xf32>
    %104 = arith.mulf %99, %103 : vector<16x32xf32>
    %105 = vector.broadcast %84 : vector<1x32xf32> to vector<16x32xf32>
    %106 = arith.mulf %104, %105 : vector<16x32xf32>
    %107 = vector.broadcast %86 : vector<1x32xf32> to vector<16x32xf32>
    %108 = arith.addf %106, %107 : vector<16x32xf32>
    %cst_62 = arith.constant 0.000000e+00 : f32
    %109 = vector.broadcast %cst_62 : f32 to vector<16x32xf32>
    %110 = arith.maximumf %108, %109 : vector<16x32xf32>
    %cst_63 = arith.constant dense<0.000000e+00> : vector<16x32xf32>
    %111 = tpu.matmul %1, %110, %cst_63 {dimension_numbers = #tpu.dot_dimension_numbers<[1], [0], [0], [1], [0, 0, 1, 1], [], []>} : vector<16x16xf32>, vector<16x32xf32>, vector<16x32xf32> -> vector<16x32xf32>
    %112 = arith.index_cast %arg0 : i32 to index
    %c0_64 = arith.constant 0 : index
    %113 = memref.load %arg1[%112, %c0_64] : memref<4x3xf32, #tpu.memory_space<smem>>
    %114 = vector.broadcast %113 : f32 to vector<16x32xf32>
    %115 = arith.mulf %114, %39 : vector<16x32xf32>
    %116 = arith.index_cast %arg0 : i32 to index
    %c1 = arith.constant 1 : index
    %117 = memref.load %arg1[%116, %c1] : memref<4x3xf32, #tpu.memory_space<smem>>
    %118 = vector.broadcast %117 : f32 to vector<16x32xf32>
    %119 = arith.mulf %118, %75 : vector<16x32xf32>
    %120 = arith.addf %115, %119 : vector<16x32xf32>
    %121 = arith.index_cast %arg0 : i32 to index
    %c2 = arith.constant 2 : index
    %122 = memref.load %arg1[%121, %c2] : memref<4x3xf32, #tpu.memory_space<smem>>
    %123 = vector.broadcast %122 : f32 to vector<16x32xf32>
    %124 = arith.mulf %123, %111 : vector<16x32xf32>
    %125 = arith.addf %120, %124 : vector<16x32xf32>
    %c0_65 = arith.constant 0 : index
    %c0_66 = arith.constant 0 : index
    %c0_67 = arith.constant 0 : index
    %126 = vector.load %arg16[%c0_65, %c0_66, %c0_67] : memref<1x16x32xf32, #tpu.memory_space<vmem>>, vector<1x16x32xf32>
    %127 = vector.shape_cast %126 : vector<1x16x32xf32> to vector<16x32xf32>
    %128 = vector.shape_cast %125 : vector<16x32xf32> to vector<1x16x32xf32>
    tpu.vector_store %arg16[%c0_65, %c0_66, %c0_67], %128 {strides = array<i32>} : memref<1x16x32xf32, #tpu.memory_space<vmem>>, vector<1x16x32xf32>,
    return
  }
  func.func @transform_0(%arg0: i32) -> (i32, i32) {
    %c0_i32 = arith.constant 0 : i32
    %c0_i32_0 = arith.constant 0 : i32
    %c0_i32_1 = arith.constant 0 : i32
    return %c0_i32, %c0_i32_0 : i32, i32
  }
  func.func @transform_1(%arg0: i32) -> (i32, i32, i32) {
    %c0_i32 = arith.constant 0 : i32
    %c0_i32_0 = arith.constant 0 : i32
    %c0_i32_1 = arith.constant 0 : i32
    return %arg0, %c0_i32, %c0_i32_0 : i32, i32, i32
  }
  func.func @transform_2(%arg0: i32) -> (i32, i32, i32) {
    %c0_i32 = arith.constant 0 : i32
    %c0_i32_0 = arith.constant 0 : i32
    %c0_i32_1 = arith.constant 0 : i32
    return %arg0, %c0_i32, %c0_i32_0 : i32, i32, i32
  }
  func.func @transform_3(%arg0: i32) -> (i32, i32, i32) {
    %c0_i32 = arith.constant 0 : i32
    %c0_i32_0 = arith.constant 0 : i32
    %c0_i32_1 = arith.constant 0 : i32
    return %arg0, %c0_i32, %c0_i32_0 : i32, i32, i32
  }
  func.func @transform_4(%arg0: i32) -> (i32, i32, i32) {
    %c0_i32 = arith.constant 0 : i32
    %c0_i32_0 = arith.constant 0 : i32
    %c0_i32_1 = arith.constant 0 : i32
    return %arg0, %c0_i32, %c0_i32_0 : i32, i32, i32
  }
  func.func @transform_5(%arg0: i32) -> (i32, i32, i32) {
    %c0_i32 = arith.constant 0 : i32
    %c0_i32_0 = arith.constant 0 : i32
    %c0_i32_1 = arith.constant 0 : i32
    return %arg0, %c0_i32, %c0_i32_0 : i32, i32, i32
  }
  func.func @transform_6(%arg0: i32) -> (i32, i32, i32) {
    %c0_i32 = arith.constant 0 : i32
    %c0_i32_0 = arith.constant 0 : i32
    %c0_i32_1 = arith.constant 0 : i32
    return %arg0, %c0_i32, %c0_i32_0 : i32, i32, i32
  }
  func.func @transform_7(%arg0: i32) -> (i32, i32, i32) {
    %c0_i32 = arith.constant 0 : i32
    %c0_i32_0 = arith.constant 0 : i32
    %c0_i32_1 = arith.constant 0 : i32
    return %arg0, %c0_i32, %c0_i32_0 : i32, i32, i32
  }
  func.func @transform_8(%arg0: i32) -> (i32, i32, i32) {
    %c0_i32 = arith.constant 0 : i32
    %c0_i32_0 = arith.constant 0 : i32
    %c0_i32_1 = arith.constant 0 : i32
    return %arg0, %c0_i32, %c0_i32_0 : i32, i32, i32
  }
  func.func @transform_9(%arg0: i32) -> (i32, i32, i32) {
    %c0_i32 = arith.constant 0 : i32
    %c0_i32_0 = arith.constant 0 : i32
    %c0_i32_1 = arith.constant 0 : i32
    return %arg0, %c0_i32, %c0_i32_0 : i32, i32, i32
  }
  func.func @transform_10(%arg0: i32) -> (i32, i32, i32) {
    %c0_i32 = arith.constant 0 : i32
    %c0_i32_0 = arith.constant 0 : i32
    %c0_i32_1 = arith.constant 0 : i32
    return %arg0, %c0_i32, %c0_i32_0 : i32, i32, i32
  }
  func.func @transform_11(%arg0: i32) -> (i32, i32, i32) {
    %c0_i32 = arith.constant 0 : i32
    %c0_i32_0 = arith.constant 0 : i32
    %c0_i32_1 = arith.constant 0 : i32
    return %arg0, %c0_i32, %c0_i32_0 : i32, i32, i32
  }
  func.func @transform_12(%arg0: i32) -> (i32, i32, i32) {
    %c0_i32 = arith.constant 0 : i32
    %c0_i32_0 = arith.constant 0 : i32
    %c0_i32_1 = arith.constant 0 : i32
    return %arg0, %c0_i32, %c0_i32_0 : i32, i32, i32
  }
  func.func @transform_13(%arg0: i32) -> (i32, i32, i32) {
    %c0_i32 = arith.constant 0 : i32
    %c0_i32_0 = arith.constant 0 : i32
    %c0_i32_1 = arith.constant 0 : i32
    return %arg0, %c0_i32, %c0_i32_0 : i32, i32, i32
  }
  func.func @transform_14(%arg0: i32) -> (i32, i32, i32) {
    %c0_i32 = arith.constant 0 : i32
    %c0_i32_0 = arith.constant 0 : i32
    %c0_i32_1 = arith.constant 0 : i32
    return %arg0, %c0_i32, %c0_i32_0 : i32, i32, i32
  }
  func.func @transform_15(%arg0: i32) -> (i32, i32, i32) {
    %c0_i32 = arith.constant 0 : i32
    %c0_i32_0 = arith.constant 0 : i32
    %c0_i32_1 = arith.constant 0 : i32
    return %arg0, %c0_i32, %c0_i32_0 : i32, i32, i32
  }
}

module attributes {stable_mosaic.version = 11 : i64} {
  func.func @fusion_scores_loss_kernel(%arg0: memref<4x1xi32, #tpu.memory_space<vmem>>, %arg1: memref<16x128xf32, #tpu.memory_space<vmem>>, %arg2: memref<128x32xf32, #tpu.memory_space<vmem>>, %arg3: memref<1x32xf32, #tpu.memory_space<vmem>>, %arg4: memref<32x32xf32, #tpu.memory_space<vmem>>, %arg5: memref<1x32xf32, #tpu.memory_space<vmem>>, %arg6: memref<128x32xf32, #tpu.memory_space<vmem>>, %arg7: memref<1x32xf32, #tpu.memory_space<vmem>>, %arg8: memref<32x32xf32, #tpu.memory_space<vmem>>, %arg9: memref<1x32xf32, #tpu.memory_space<vmem>>, %arg10: memref<4x8xf32, #tpu.memory_space<vmem>>, %arg11: memref<4x8xf32, #tpu.memory_space<vmem>>, %arg12: memref<1x1xf32, #tpu.memory_space<vmem>>) attributes {dimension_semantics = [], scalar_prefetch = 0 : i64, scratch_operands = 0 : i64, tpu.core_type = #tpu.core_type<tc>} {
    %c0 = arith.constant 0 : index
    %c0_0 = arith.constant 0 : index
    %0 = vector.load %arg0[%c0, %c0_0] : memref<4x1xi32, #tpu.memory_space<vmem>>, vector<4x1xi32>
    %1 = tpu.iota {dimensions = array<i32: 1>} : vector<4x8xi32>
    %2 = vector.broadcast %0 : vector<4x1xi32> to vector<4x8xi32>
    %3 = arith.cmpi eq, %1, %2 : vector<4x8xi32>
    %4 = arith.extui %3 : vector<4x8xi1> to vector<4x8xi32>
    %5 = arith.sitofp %4 : vector<4x8xi32> to vector<4x8xf32>
    %c0_1 = arith.constant 0 : index
    %c0_2 = arith.constant 0 : index
    %6 = vector.load %arg1[%c0_1, %c0_2] : memref<16x128xf32, #tpu.memory_space<vmem>>, vector<8x128xf32>
    %cst = arith.constant dense<0.000000e+00> : vector<4x128xf32>
    %7 = tpu.matmul %5, %6, %cst {dimension_numbers = #tpu.dot_dimension_numbers<[1], [0], [0], [1], [0, 0, 1, 1], [], []>} : vector<4x8xf32>, vector<8x128xf32>, vector<4x128xf32> -> vector<4x128xf32>
    %c8 = arith.constant 8 : index
    %c0_3 = arith.constant 0 : index
    %8 = vector.load %arg1[%c8, %c0_3] : memref<16x128xf32, #tpu.memory_space<vmem>>, vector<8x128xf32>
    %cst_4 = arith.constant dense<0.000000e+00> : vector<4x8xf32>
    %9 = tpu.matmul %7, %8, %cst_4 {dimension_numbers = #tpu.dot_dimension_numbers<[1], [1], [0], [0], [0, 0, 1, 0], [], []>} : vector<4x128xf32>, vector<8x128xf32>, vector<4x8xf32> -> vector<4x8xf32>
    %cst_5 = arith.constant 4.000000e+00 : f32
    %10 = vector.broadcast %cst_5 : f32 to vector<4x8xf32>
    %11 = arith.divf %9, %10 : vector<4x8xf32>
    %c0_6 = arith.constant 0 : index
    %c0_7 = arith.constant 0 : index
    %12 = vector.load %arg2[%c0_6, %c0_7] : memref<128x32xf32, #tpu.memory_space<vmem>>, vector<128x32xf32>
    %cst_8 = arith.constant dense<0.000000e+00> : vector<4x32xf32>
    %13 = tpu.matmul %7, %12, %cst_8 {dimension_numbers = #tpu.dot_dimension_numbers<[1], [0], [0], [1], [0, 0, 1, 1], [], []>} : vector<4x128xf32>, vector<128x32xf32>, vector<4x32xf32> -> vector<4x32xf32>
    %c0_9 = arith.constant 0 : index
    %c0_10 = arith.constant 0 : index
    %14 = vector.load %arg3[%c0_9, %c0_10] : memref<1x32xf32, #tpu.memory_space<vmem>>, vector<1x32xf32>
    %15 = vector.broadcast %14 : vector<1x32xf32> to vector<4x32xf32>
    %16 = arith.addf %13, %15 : vector<4x32xf32>
    %cst_11 = arith.constant 0.000000e+00 : f32
    %17 = vector.broadcast %cst_11 : f32 to vector<4x32xf32>
    %18 = arith.maximumf %16, %17 : vector<4x32xf32>
    %c0_12 = arith.constant 0 : index
    %c0_13 = arith.constant 0 : index
    %19 = vector.load %arg4[%c0_12, %c0_13] : memref<32x32xf32, #tpu.memory_space<vmem>>, vector<32x32xf32>
    %cst_14 = arith.constant dense<0.000000e+00> : vector<4x32xf32>
    %20 = tpu.matmul %18, %19, %cst_14 {dimension_numbers = #tpu.dot_dimension_numbers<[1], [0], [0], [1], [0, 0, 1, 1], [], []>} : vector<4x32xf32>, vector<32x32xf32>, vector<4x32xf32> -> vector<4x32xf32>
    %c0_15 = arith.constant 0 : index
    %c0_16 = arith.constant 0 : index
    %21 = vector.load %arg5[%c0_15, %c0_16] : memref<1x32xf32, #tpu.memory_space<vmem>>, vector<1x32xf32>
    %22 = vector.broadcast %21 : vector<1x32xf32> to vector<4x32xf32>
    %23 = arith.addf %20, %22 : vector<4x32xf32>
    %c0_17 = arith.constant 0 : index
    %c0_18 = arith.constant 0 : index
    %24 = vector.load %arg6[%c0_17, %c0_18] : memref<128x32xf32, #tpu.memory_space<vmem>>, vector<128x32xf32>
    %cst_19 = arith.constant dense<0.000000e+00> : vector<8x32xf32>
    %25 = tpu.matmul %8, %24, %cst_19 {dimension_numbers = #tpu.dot_dimension_numbers<[1], [0], [0], [1], [0, 0, 1, 1], [], []>} : vector<8x128xf32>, vector<128x32xf32>, vector<8x32xf32> -> vector<8x32xf32>
    %c0_20 = arith.constant 0 : index
    %c0_21 = arith.constant 0 : index
    %26 = vector.load %arg7[%c0_20, %c0_21] : memref<1x32xf32, #tpu.memory_space<vmem>>, vector<1x32xf32>
    %27 = vector.broadcast %26 : vector<1x32xf32> to vector<8x32xf32>
    %28 = arith.addf %25, %27 : vector<8x32xf32>
    %cst_22 = arith.constant 0.000000e+00 : f32
    %29 = vector.broadcast %cst_22 : f32 to vector<8x32xf32>
    %30 = arith.maximumf %28, %29 : vector<8x32xf32>
    %c0_23 = arith.constant 0 : index
    %c0_24 = arith.constant 0 : index
    %31 = vector.load %arg8[%c0_23, %c0_24] : memref<32x32xf32, #tpu.memory_space<vmem>>, vector<32x32xf32>
    %cst_25 = arith.constant dense<0.000000e+00> : vector<8x32xf32>
    %32 = tpu.matmul %30, %31, %cst_25 {dimension_numbers = #tpu.dot_dimension_numbers<[1], [0], [0], [1], [0, 0, 1, 1], [], []>} : vector<8x32xf32>, vector<32x32xf32>, vector<8x32xf32> -> vector<8x32xf32>
    %c0_26 = arith.constant 0 : index
    %c0_27 = arith.constant 0 : index
    %33 = vector.load %arg9[%c0_26, %c0_27] : memref<1x32xf32, #tpu.memory_space<vmem>>, vector<1x32xf32>
    %34 = vector.broadcast %33 : vector<1x32xf32> to vector<8x32xf32>
    %35 = arith.addf %32, %34 : vector<8x32xf32>
    %cst_28 = arith.constant dense<0.000000e+00> : vector<4x8xf32>
    %36 = tpu.matmul %23, %35, %cst_28 {dimension_numbers = #tpu.dot_dimension_numbers<[1], [1], [0], [0], [0, 0, 1, 0], [], []>} : vector<4x32xf32>, vector<8x32xf32>, vector<4x8xf32> -> vector<4x8xf32>
    %37 = arith.addf %11, %36 : vector<4x8xf32>
    %cst_29 = arith.constant 5.000000e-01 : f32
    %38 = vector.broadcast %cst_29 : f32 to vector<4x8xf32>
    %39 = arith.mulf %37, %38 : vector<4x8xf32>
    %c0_30 = arith.constant 0 : index
    %c0_31 = arith.constant 0 : index
    %40 = vector.load %arg10[%c0_30, %c0_31] : memref<4x8xf32, #tpu.memory_space<vmem>>, vector<4x8xf32>
    %cst_32 = arith.constant 0.000000e+00 : f32
    %41 = vector.broadcast %cst_32 : f32 to vector<4x8xf32>
    %42 = arith.maximumf %39, %41 : vector<4x8xf32>
    %43 = math.absf %39 : vector<4x8xf32>
    %cst_33 = arith.constant 0.000000e+00 : f32
    %44 = vector.broadcast %cst_33 : f32 to vector<4x8xf32>
    %45 = arith.subf %44, %43 : vector<4x8xf32>
    %46 = math.exp %45 : vector<4x8xf32>
    %47 = math.log1p %46 : vector<4x8xf32>
    %48 = arith.addf %42, %47 : vector<4x8xf32>
    %49 = arith.subf %48, %39 : vector<4x8xf32>
    %cst_34 = arith.constant 0.000000e+00 : f32
    %50 = vector.broadcast %cst_34 : f32 to vector<4x8xf32>
    %51 = arith.subf %50, %49 : vector<4x8xf32>
    %52 = math.exp %51 : vector<4x8xf32>
    %c0_35 = arith.constant 0 : index
    %c0_36 = arith.constant 0 : index
    %53 = vector.load %arg11[%c0_35, %c0_36] : memref<4x8xf32, #tpu.memory_space<vmem>>, vector<4x8xf32>
    tpu.vector_store %arg11[%c0_35, %c0_36], %52 {strides = array<i32>} : memref<4x8xf32, #tpu.memory_space<vmem>>, vector<4x8xf32>,
    %cst_37 = arith.constant 2.000000e+01 : f32
    %54 = vector.broadcast %cst_37 : f32 to vector<4x8xf32>
    %55 = arith.mulf %54, %40 : vector<4x8xf32>
    %56 = arith.mulf %55, %49 : vector<4x8xf32>
    %cst_38 = arith.constant 1.000000e+00 : f32
    %57 = vector.broadcast %cst_38 : f32 to vector<4x8xf32>
    %58 = arith.subf %57, %40 : vector<4x8xf32>
    %59 = arith.mulf %58, %48 : vector<4x8xf32>
    %60 = arith.addf %56, %59 : vector<4x8xf32>
    %61 = vector.shape_cast %60 : vector<4x8xf32> to vector<1x4x8xf32>
    %cst_39 = arith.constant dense<0.000000e+00> : vector<1xf32>
    %62 = vector.multi_reduction <add>, %61, %cst_39 [1, 2] : vector<1x4x8xf32> to vector<1xf32>
    %63 = vector.shape_cast %62 : vector<1xf32> to vector<1x1x1xf32>
    %64 = vector.extract %63[0, 0, 0] : f32 from vector<1x1x1xf32>
    %cst_40 = arith.constant 3.200000e+01 : f32
    %65 = arith.divf %64, %cst_40 : f32
    %66 = vector.broadcast %65 : f32 to vector<1x1xf32>
    %c0_41 = arith.constant 0 : index
    %c0_42 = arith.constant 0 : index
    %67 = vector.load %arg12[%c0_41, %c0_42] : memref<1x1xf32, #tpu.memory_space<vmem>>, vector<1x1xf32>
    tpu.vector_store %arg12[%c0_41, %c0_42], %66 {strides = array<i32>} : memref<1x1xf32, #tpu.memory_space<vmem>>, vector<1x1xf32>,
    return
  }
}

</mosaic_0001>

<llo_original>
// kernel: my_model_forward.3
$region0: #{my_model_forward.3}
  #allocation0 [shape = 'u32[]', space=smem, size = 0x4, offset = 0x4, fixed_abs, tag = 'smem constant byte address 0x4 - core index']
  #allocation1 [shape = 'u32[144,128]{1,0:T(1,128)}', space=vmem, size = 0x12000, scoped, tag = 'internal scratch']
  %s0 = inlined_call_operand.vmem [shape: s32[4,1], index: 0, kind: input, shape index: {}]
  %s1 = inlined_call_operand.vmem [shape: f32[16,128], index: 1, kind: input, shape index: {}]
  %s2 = inlined_call_operand.vmem [shape: f32[128,32], index: 2, kind: input, shape index: {}]
  %s3 = inlined_call_operand.vmem [shape: f32[1,32], index: 3, kind: input, shape index: {}]
  %s4 = inlined_call_operand.vmem [shape: f32[32,32], index: 4, kind: input, shape index: {}]
  %s5 = inlined_call_operand.vmem [shape: f32[1,32], index: 5, kind: input, shape index: {}]
  %s6 = inlined_call_operand.vmem [shape: f32[128,32], index: 6, kind: input, shape index: {}]
  %s7 = inlined_call_operand.vmem [shape: f32[1,32], index: 7, kind: input, shape index: {}]
  %s8 = inlined_call_operand.vmem [shape: f32[32,32], index: 8, kind: input, shape index: {}]
  %s9 = inlined_call_operand.vmem [shape: f32[1,32], index: 9, kind: input, shape index: {}]
  %s10 = inlined_call_operand.vmem [shape: f32[4,8], index: 10, kind: input, shape index: {}]
  %s11 = inlined_call_operand.vmem [shape: f32[4,8], index: 11, kind: output, shape index: {0}]
  %s12 = inlined_call_operand.hbm [shape: f32[1,1], index: 12, kind: output, shape index: {1}]
  %13 = xla_tuple %s11, %s12
  %s14 = sld [smem:[#allocation0]]
  $region62: #{my_model_forward.3} parent=0
    _
  %s16 = ssub.s32 1, %s14
  %s17 = scalar_select 0, %s16, %s14
  $region1: #{my_model_forward.3} parent=0
    #allocation2 [shape = 'u8[512]{0}', space=vmem, size = 0x400, scoped, tag = 'output window, operand 1, single buffered']
    #allocation3 [shape = 's32[1]{0}', space=sflag, size = 0x4, scoped, tag = 'scoped memory for my_model_forward.3']
    %18 = vsyncpa [#allocation3], 0
    // Predicated region
    $region2: #{my_model_forward.3} parent=1 // pred_check
      _
    $region3: #{my_model_forward.3} parent=1 // pred_check_branch
      %20 = sbr.rel (0) target = $region5
    $region4: #{my_model_forward.3} parent=1 // pred_region
      _
    $region5: #{my_model_forward.3} parent=1 // pred_fallthru
      _
    // Predicated region
    $region6: #{my_model_forward.3} parent=1 // pred_check
      _
    $region7: #{my_model_forward.3} parent=1 // pred_check_branch
      %22 = sbr.rel (0) target = $region9
    $region8: #{my_model_forward.3} parent=1 // pred_region
      _
    $region9: #{my_model_forward.3} parent=1 // pred_fallthru
      _
    // Predicated region
    $region10: #{my_model_forward.3} parent=1 // pred_check
      _
    $region11: #{my_model_forward.3} parent=1 // pred_check_branch
      %24 = sbr.rel (0) target = $region13
    $region12: #{my_model_forward.3} parent=1 // pred_region
      _
    $region13: #{my_model_forward.3} parent=1 // pred_fallthru
      _
    // Predicated region
    $region14: #{my_model_forward.3} parent=1 // pred_check
      _
    $region15: #{my_model_forward.3} parent=1 // pred_check_branch
      %26 = sbr.rel (0) target = $region17
    $region16: #{my_model_forward.3} parent=1 // pred_region
      _
    $region17: #{my_model_forward.3} parent=1 // pred_fallthru
      _
    // Predicated region
    $region18: #{my_model_forward.3} parent=1 // pred_check
      _
    $region19: #{my_model_forward.3} parent=1 // pred_check_branch
      %28 = sbr.rel (0) target = $region21
    $region20: #{my_model_forward.3} parent=1 // pred_region
      _
    $region21: #{my_model_forward.3} parent=1 // pred_fallthru
      _
    // Predicated region
    $region22: #{my_model_forward.3} parent=1 // pred_check
      _
    $region23: #{my_model_forward.3} parent=1 // pred_check_branch
      %30 = sbr.rel (0) target = $region25
    $region24: #{my_model_forward.3} parent=1 // pred_region
      _
    $region25: #{my_model_forward.3} parent=1 // pred_fallthru
      _
    // Predicated region
    $region26: #{my_model_forward.3} parent=1 // pred_check
      _
    $region27: #{my_model_forward.3} parent=1 // pred_check_branch
      %32 = sbr.rel (0) target = $region29
    $region28: #{my_model_forward.3} parent=1 // pred_region
      _
    $region29: #{my_model_forward.3} parent=1 // pred_fallthru
      _
    // Predicated region
    $region30: #{my_model_forward.3} parent=1 // pred_check
      _
    $region31: #{my_model_forward.3} parent=1 // pred_check_branch
      %34 = sbr.rel (0) target = $region33
    $region32: #{my_model_forward.3} parent=1 // pred_region
      _
    $region33: #{my_model_forward.3} parent=1 // pred_fallthru
      _
    // Predicated region
    $region34: #{my_model_forward.3} parent=1 // pred_check
      _
    $region35: #{my_model_forward.3} parent=1 // pred_check_branch
      %36 = sbr.rel (0) target = $region37
    $region36: #{my_model_forward.3} parent=1 // pred_region
      _
    $region37: #{my_model_forward.3} parent=1 // pred_fallthru
      _
    // Predicated region
    $region38: #{my_model_forward.3} parent=1 // pred_check
      _
    $region39: #{my_model_forward.3} parent=1 // pred_check_branch
      %38 = sbr.rel (0) target = $region41
    $region40: #{my_model_forward.3} parent=1 // pred_region
      _
    $region41: #{my_model_forward.3} parent=1 // pred_fallthru
      _
    // Predicated region
    $region42: #{my_model_forward.3} parent=1 // pred_check
      _
    $region43: #{my_model_forward.3} parent=1 // pred_check_branch
      %40 = sbr.rel (0) target = $region45
    $region44: #{my_model_forward.3} parent=1 // pred_region
      _
    $region45: #{my_model_forward.3} parent=1 // pred_fallthru
      _
    %v41 = vld [vmem:[%s0] sm:$0xf]
    %v42 = vlaneseq
    %v43 = vand.u32 %v42, 127
    %44 = vset.pattern.permute.xlu0 0
    %45 = vperm.xlu0 %44, %v41
    %v46 = vpop.permute.xlu0 %45
    %vm47 = vcmp.eq.s32.totalorder %v43, %v46
    %v48 = vsel %vm47, 1, 0
    %v49 = vcvt.s32.f32 %v48
    %v50 = vld [vmem:[%s1] sm:$0xff]
    %vm51 = vcmask 64512
    %v53 = vsel %vm51, %v49, 0
    %55 = vmatprep.subr.mxu0 0.0
    %56 = vmatpush1.msra.mxu0 %v50
    %57 = vmatprep.subr.mxu0 0.0
    %58 = vmatpush1.msra.mxu0 0.0
    %59 = vmatprep.subr.mxu0 0.0
    %60 = vmatpush1.msra.mxu0 0.0
    %61 = vmatprep.subr.mxu0 0.0
    %62 = vmatpush1.msra.mxu0 0.0
    %63 = vmatprep.subr.mxu0 0.0
    %64 = vmatpush1.msra.mxu0 0.0
    %65 = vmatprep.subr.mxu0 0.0
    %66 = vmatpush1.msra.mxu0 0.0
    %67 = vmatprep.subr.mxu0 0.0
    %68 = vmatpush1.msra.mxu0 0.0
    %69 = vmatprep.subr.mxu0 0.0
    %70 = vmatpush1.msra.mxu0 0.0
    %71 = vmatprep.subr.mxu0 0.0
    %72 = vmatpush1.msra.mxu0 0.0
    %73 = vmatprep.subr.mxu0 0.0
    %74 = vmatpush1.msra.mxu0 0.0
    %75 = vmatprep.subr.mxu0 0.0
    %76 = vmatpush1.msra.mxu0 0.0
    %77 = vmatprep.subr.mxu0 0.0
    %78 = vmatpush1.msra.mxu0 0.0
    %79 = vmatprep.subr.mxu0 0.0
    %80 = vmatpush1.msra.mxu0 0.0
    %81 = vmatprep.subr.mxu0 0.0
    %82 = vmatpush1.msra.mxu0 0.0
    %83 = vmatprep.subr.mxu0 0.0
    %84 = vmatpush1.msra.mxu0 0.0
    %85 = vmatprep.subr.mxu0 0.0
    %86 = vmatpush1.msra.mxu0 0.0
    %87 = vmatprep.subr.mxu0 0.0
    %88 = vmatpush1.msra.mxu0 0.0
    %89 = vmatprep.subr.mxu0 0.0
    %90 = vmatpush1.msra.mxu0 0.0
    %91 = vmatprep.subr.mxu0 0.0
    %92 = vmatpush1.msra.mxu0 0.0
    %93 = vmatprep.subr.mxu0 0.0
    %94 = vmatpush1.msra.mxu0 0.0
    %95 = vmatprep.subr.mxu0 0.0
    %96 = vmatpush1.msra.mxu0 0.0
    %97 = vmatprep.subr.mxu0 0.0
    %98 = vmatpush1.msra.mxu0 0.0
    %99 = vmatprep.subr.mxu0 0.0
    %100 = vmatpush1.msra.mxu0 0.0
    %101 = vmatprep.subr.mxu0 0.0
    %102 = vmatpush1.msra.mxu0 0.0
    %103 = vmatprep.subr.mxu0 0.0
    %104 = vmatpush1.msra.mxu0 0.0
    %105 = vmatprep.subr.mxu0 0.0
    %106 = vmatpush1.msra.mxu0 0.0
    %107 = vmatprep.subr.mxu0 0.0
    %108 = vmatpush1.msra.mxu0 0.0
    %109 = vmatprep.subr.mxu0 0.0
    %110 = vmatpush1.msra.mxu0 0.0
    %111 = vmatprep.subr.mxu0 0.0
    %112 = vmatpush1.msra.mxu0 0.0
    %113 = vmatprep.subr.mxu0 0.0
    %114 = vmatpush1.msra.mxu0 0.0
    %115 = vmatprep.subr.mxu0 0.0
    %116 = vmatpush1.msra.mxu0 0.0
    %117 = vmatprep.subr.mxu0 0.0
    %118 = vmatpush1.msra.mxu0 0.0
    %119 = vmatprep.mubr.f32.mxu0 0.0
    %120 = vmatmul.mubr.f32.gmra.mrb[0].mxu0 %v53
    %v121 = vpop.f32.mrb[0].mxu0
    %v122 = vadd.f32 0.0, %v121
    %v123 = vpop.f32.mrb[0].mxu0
    %124 = vdwg.mxu0
    %v125 = vld [vmem:[%s1 + $0x8] sm:$0xff]
    %126 = vmatprep.subr.mxu0 0.0
    %127 = vmatpush1.xpose.msra.mxu0 %v125
    %128 = vmatprep.subr.mxu0 0.0
    %129 = vmatpush1.xpose.msra.mxu0 0.0
    %130 = vmatprep.subr.mxu0 0.0
    %131 = vmatpush1.xpose.msra.mxu0 0.0
    %132 = vmatprep.subr.mxu0 0.0
    %133 = vmatpush1.xpose.msra.mxu0 0.0
    %134 = vmatprep.subr.mxu0 0.0
    %135 = vmatpush1.xpose.msra.mxu0 0.0
    %136 = vmatprep.subr.mxu0 0.0
    %137 = vmatpush1.xpose.msra.mxu0 0.0
    %138 = vmatprep.subr.mxu0 0.0
    %139 = vmatpush1.xpose.msra.mxu0 0.0
    %140 = vmatprep.subr.mxu0 0.0
    %141 = vmatpush1.xpose.msra.mxu0 0.0
    %142 = vmatprep.subr.mxu0 0.0
    %143 = vmatpush1.xpose.msra.mxu0 0.0
    %144 = vmatprep.subr.mxu0 0.0
    %145 = vmatpush1.xpose.msra.mxu0 0.0
    %146 = vmatprep.subr.mxu0 0.0
    %147 = vmatpush1.xpose.msra.mxu0 0.0
    %148 = vmatprep.subr.mxu0 0.0
    %149 = vmatpush1.xpose.msra.mxu0 0.0
    %150 = vmatprep.subr.mxu0 0.0
    %151 = vmatpush1.xpose.msra.mxu0 0.0
    %152 = vmatprep.subr.mxu0 0.0
    %153 = vmatpush1.xpose.msra.mxu0 0.0
    %154 = vmatprep.subr.mxu0 0.0
    %155 = vmatpush1.xpose.msra.mxu0 0.0
    %156 = vmatprep.subr.mxu0 0.0
    %157 = vmatpush1.xpose.msra.mxu0 0.0
    %158 = vmatprep.subr.mxu0 0.0
    %159 = vmatpush1.xpose.msra.mxu0 0.0
    %160 = vmatprep.subr.mxu0 0.0
    %161 = vmatpush1.xpose.msra.mxu0 0.0
    %162 = vmatprep.subr.mxu0 0.0
    %163 = vmatpush1.xpose.msra.mxu0 0.0
    %164 = vmatprep.subr.mxu0 0.0
    %165 = vmatpush1.xpose.msra.mxu0 0.0
    %166 = vmatprep.subr.mxu0 0.0
    %167 = vmatpush1.xpose.msra.mxu0 0.0
    %168 = vmatprep.subr.mxu0 0.0
    %169 = vmatpush1.xpose.msra.mxu0 0.0
    %170 = vmatprep.subr.mxu0 0.0
    %171 = vmatpush1.xpose.msra.mxu0 0.0
    %172 = vmatprep.subr.mxu0 0.0
    %173 = vmatpush1.xpose.msra.mxu0 0.0
    %174 = vmatprep.subr.mxu0 0.0
    %175 = vmatpush1.xpose.msra.mxu0 0.0
    %176 = vmatprep.subr.mxu0 0.0
    %177 = vmatpush1.xpose.msra.mxu0 0.0
    %178 = vmatprep.subr.mxu0 0.0
    %179 = vmatpush1.xpose.msra.mxu0 0.0
    %180 = vmatprep.subr.mxu0 0.0
    %181 = vmatpush1.xpose.msra.mxu0 0.0
    %182 = vmatprep.subr.mxu0 0.0
    %183 = vmatpush1.xpose.msra.mxu0 0.0
    %184 = vmatprep.subr.mxu0 0.0
    %185 = vmatpush1.xpose.msra.mxu0 0.0
    %186 = vmatprep.subr.mxu0 0.0
    %187 = vmatpush1.xpose.msra.mxu0 0.0
    %188 = vmatprep.subr.mxu0 0.0
    %189 = vmatpush1.xpose.msra.mxu0 0.0
    %190 = vmatprep.mubr.f32.mxu0 0.0
    %191 = vmatmul.mubr.f32.gmra.mrb[0].mxu0 %v122
    %v192 = vpop.f32.mrb[0].mxu0
    %v193 = vadd.f32 0.0, %v192
    %v194 = vpop.f32.mrb[0].mxu0
    %195 = vdwg.mxu0
    %v196 = vrcp.pop 4.0
    %v197 = vmul.f32 %v193, %v196
    %v198 = vld [vmem:[%s2] sm:$0xff]
    %v199 = vld [vmem:[%s2 + $0x8] sm:$0xff]
    %v200 = vld [vmem:[%s2 + $0x10] sm:$0xff]
    %v201 = vld [vmem:[%s2 + $0x18] sm:$0xff]
    %v202 = vld [vmem:[%s2 + $0x20] sm:$0xff]
    %v203 = vld [vmem:[%s2 + $0x28] sm:$0xff]
    %v204 = vld [vmem:[%s2 + $0x30] sm:$0xff]
    %v205 = vld [vmem:[%s2 + $0x38] sm:$0xff]
    %v206 = vld [vmem:[%s2 + $0x40] sm:$0xff]
    %v207 = vld [vmem:[%s2 + $0x48] sm:$0xff]
    %v208 = vld [vmem:[%s2 + $0x50] sm:$0xff]
    %v209 = vld [vmem:[%s2 + $0x58] sm:$0xff]
    %v210 = vld [vmem:[%s2 + $0x60] sm:$0xff]
    %v211 = vld [vmem:[%s2 + $0x68] sm:$0xff]
    %v212 = vld [vmem:[%s2 + $0x70] sm:$0xff]
    %v213 = vld [vmem:[%s2 + $0x78] sm:$0xff]
    %v214 = vld [vmem:[%s3] sm:$0x1]
    %v216 = vlaneseq
    %v217 = vshrl.u32 %v216, 7
    %v218 = vsub.s32 0, %v217
    %v219 = vrot.slane %v214, %v218
    %221 = vmatprep.subr.mxu0 0.0
    %222 = vmatpush1.msra.mxu0 %v198
    %223 = vmatprep.subr.mxu0 0.0
    %224 = vmatpush1.msra.mxu0 %v199
    %225 = vmatprep.subr.mxu0 0.0
    %226 = vmatpush1.msra.mxu0 %v200
    %227 = vmatprep.subr.mxu0 0.0
    %228 = vmatpush1.msra.mxu0 %v201
    %229 = vmatprep.subr.mxu0 0.0
    %230 = vmatpush1.msra.mxu0 %v202
    %231 = vmatprep.subr.mxu0 0.0
    %232 = vmatpush1.msra.mxu0 %v203
    %233 = vmatprep.subr.mxu0 0.0
    %234 = vmatpush1.msra.mxu0 %v204
    %235 = vmatprep.subr.mxu0 0.0
    %236 = vmatpush1.msra.mxu0 %v205
    %237 = vmatprep.subr.mxu0 0.0
    %238 = vmatpush1.msra.mxu0 %v206
    %239 = vmatprep.subr.mxu0 0.0
    %240 = vmatpush1.msra.mxu0 %v207
    %241 = vmatprep.subr.mxu0 0.0
    %242 = vmatpush1.msra.mxu0 %v208
    %243 = vmatprep.subr.mxu0 0.0
    %244 = vmatpush1.msra.mxu0 %v209
    %245 = vmatprep.subr.mxu0 0.0
    %246 = vmatpush1.msra.mxu0 %v210
    %247 = vmatprep.subr.mxu0 0.0
    %248 = vmatpush1.msra.mxu0 %v211
    %249 = vmatprep.subr.mxu0 0.0
    %250 = vmatpush1.msra.mxu0 %v212
    %251 = vmatprep.subr.mxu0 0.0
    %252 = vmatpush1.msra.mxu0 %v213
    %253 = vmatprep.subr.mxu0 0.0
    %254 = vmatpush1.msra.mxu0 0.0
    %255 = vmatprep.subr.mxu0 0.0
    %256 = vmatpush1.msra.mxu0 0.0
    %257 = vmatprep.subr.mxu0 0.0
    %258 = vmatpush1.msra.mxu0 0.0
    %259 = vmatprep.subr.mxu0 0.0
    %260 = vmatpush1.msra.mxu0 0.0
    %261 = vmatprep.subr.mxu0 0.0
    %262 = vmatpush1.msra.mxu0 0.0
    %263 = vmatprep.subr.mxu0 0.0
    %264 = vmatpush1.msra.mxu0 0.0
    %265 = vmatprep.subr.mxu0 0.0
    %266 = vmatpush1.msra.mxu0 0.0
    %267 = vmatprep.subr.mxu0 0.0
    %268 = vmatpush1.msra.mxu0 0.0
    %269 = vmatprep.subr.mxu0 0.0
    %270 = vmatpush1.msra.mxu0 0.0
    %271 = vmatprep.subr.mxu0 0.0
    %272 = vmatpush1.msra.mxu0 0.0
    %273 = vmatprep.subr.mxu0 0.0
    %274 = vmatpush1.msra.mxu0 0.0
    %275 = vmatprep.subr.mxu0 0.0
    %276 = vmatpush1.msra.mxu0 0.0
    %277 = vmatprep.subr.mxu0 0.0
    %278 = vmatpush1.msra.mxu0 0.0
    %279 = vmatprep.subr.mxu0 0.0
    %280 = vmatpush1.msra.mxu0 0.0
    %281 = vmatprep.subr.mxu0 0.0
    %282 = vmatpush1.msra.mxu0 0.0
    %283 = vmatprep.subr.mxu0 0.0
    %284 = vmatpush1.msra.mxu0 0.0
    %285 = vmatprep.mubr.f32.mxu0 0.0
    %286 = vmatmul.mubr.f32.gmra.mrb[0].mxu0 %v122
    %v287 = vpop.f32.mrb[0].mxu0
    %v288 = vadd.f32 %v219, %v287
    %v289 = vpop.f32.mrb[0].mxu0
    %290 = vdwg.mxu0
    %v291 = vmax.f32 %v288, 0.0
    %v292 = vld [vmem:[%s4] sm:$0xff]
    %v293 = vld [vmem:[%s4 + $0x8] sm:$0xff]
    %v294 = vld [vmem:[%s4 + $0x10] sm:$0xff]
    %v295 = vld [vmem:[%s4 + $0x18] sm:$0xff]
    %v296 = vld [vmem:[%s5] sm:$0x1]
    %v298 = vlaneseq
    %v299 = vshrl.u32 %v298, 7
    %v300 = vsub.s32 0, %v299
    %v301 = vrot.slane %v296, %v300
    %vm303 = vcmask 261120
    %v305 = vsel %vm303, %v291, 0
    %307 = vmatprep.subr.mxu0 0.0
    %308 = vmatpush1.msra.mxu0 %v292
    %309 = vmatprep.subr.mxu0 0.0
    %310 = vmatpush1.msra.mxu0 %v293
    %311 = vmatprep.subr.mxu0 0.0
    %312 = vmatpush1.msra.mxu0 %v294
    %313 = vmatprep.subr.mxu0 0.0
    %314 = vmatpush1.msra.mxu0 %v295
    %315 = vmatprep.subr.mxu0 0.0
    %316 = vmatpush1.msra.mxu0 0.0
    %317 = vmatprep.subr.mxu0 0.0
    %318 = vmatpush1.msra.mxu0 0.0
    %319 = vmatprep.subr.mxu0 0.0
    %320 = vmatpush1.msra.mxu0 0.0
    %321 = vmatprep.subr.mxu0 0.0
    %322 = vmatpush1.msra.mxu0 0.0
    %323 = vmatprep.subr.mxu0 0.0
    %324 = vmatpush1.msra.mxu0 0.0
    %325 = vmatprep.subr.mxu0 0.0
    %326 = vmatpush1.msra.mxu0 0.0
    %327 = vmatprep.subr.mxu0 0.0
    %328 = vmatpush1.msra.mxu0 0.0
    %329 = vmatprep.subr.mxu0 0.0
    %330 = vmatpush1.msra.mxu0 0.0
    %331 = vmatprep.subr.mxu0 0.0
    %332 = vmatpush1.msra.mxu0 0.0
    %333 = vmatprep.subr.mxu0 0.0
    %334 = vmatpush1.msra.mxu0 0.0
    %335 = vmatprep.subr.mxu0 0.0
    %336 = vmatpush1.msra.mxu0 0.0
    %337 = vmatprep.subr.mxu0 0.0
    %338 = vmatpush1.msra.mxu0 0.0
    %339 = vmatprep.subr.mxu0 0.0
    %340 = vmatpush1.msra.mxu0 0.0
    %341 = vmatprep.subr.mxu0 0.0
    %342 = vmatpush1.msra.mxu0 0.0
    %343 = vmatprep.subr.mxu0 0.0
    %344 = vmatpush1.msra.mxu0 0.0
    %345 = vmatprep.subr.mxu0 0.0
    %346 = vmatpush1.msra.mxu0 0.0
    %347 = vmatprep.subr.mxu0 0.0
    %348 = vmatpush1.msra.mxu0 0.0
    %349 = vmatprep.subr.mxu0 0.0
    %350 = vmatpush1.msra.mxu0 0.0
    %351 = vmatprep.subr.mxu0 0.0
    %352 = vmatpush1.msra.mxu0 0.0
    %353 = vmatprep.subr.mxu0 0.0
    %354 = vmatpush1.msra.mxu0 0.0
    %355 = vmatprep.subr.mxu0 0.0
    %356 = vmatpush1.msra.mxu0 0.0
    %357 = vmatprep.subr.mxu0 0.0
    %358 = vmatpush1.msra.mxu0 0.0
    %359 = vmatprep.subr.mxu0 0.0
    %360 = vmatpush1.msra.mxu0 0.0
    %361 = vmatprep.subr.mxu0 0.0
    %362 = vmatpush1.msra.mxu0 0.0
    %363 = vmatprep.subr.mxu0 0.0
    %364 = vmatpush1.msra.mxu0 0.0
    %365 = vmatprep.subr.mxu0 0.0
    %366 = vmatpush1.msra.mxu0 0.0
    %367 = vmatprep.subr.mxu0 0.0
    %368 = vmatpush1.msra.mxu0 0.0
    %369 = vmatprep.subr.mxu0 0.0
    %370 = vmatpush1.msra.mxu0 0.0
    %371 = vmatprep.mubr.f32.mxu0 0.0
    %372 = vmatmul.mubr.f32.gmra.mrb[0].mxu0 %v305
    %v373 = vpop.f32.mrb[0].mxu0
    %v374 = vadd.f32 %v301, %v373
    %v375 = vpop.f32.mrb[0].mxu0
    %376 = vdwg.mxu0
    %v377 = vld [vmem:[%s6] sm:$0xff]
    %v378 = vld [vmem:[%s6 + $0x8] sm:$0xff]
    %v379 = vld [vmem:[%s6 + $0x10] sm:$0xff]
    %v380 = vld [vmem:[%s6 + $0x18] sm:$0xff]
    %v381 = vld [vmem:[%s6 + $0x20] sm:$0xff]
    %v382 = vld [vmem:[%s6 + $0x28] sm:$0xff]
    %v383 = vld [vmem:[%s6 + $0x30] sm:$0xff]
    %v384 = vld [vmem:[%s6 + $0x38] sm:$0xff]
    %v385 = vld [vmem:[%s6 + $0x40] sm:$0xff]
    %v386 = vld [vmem:[%s6 + $0x48] sm:$0xff]
    %v387 = vld [vmem:[%s6 + $0x50] sm:$0xff]
    %v388 = vld [vmem:[%s6 + $0x58] sm:$0xff]
    %v389 = vld [vmem:[%s6 + $0x60] sm:$0xff]
    %v390 = vld [vmem:[%s6 + $0x68] sm:$0xff]
    %v391 = vld [vmem:[%s6 + $0x70] sm:$0xff]
    %v392 = vld [vmem:[%s6 + $0x78] sm:$0xff]
    %v393 = vld [vmem:[%s7] sm:$0x1]
    %v395 = vlaneseq
    %v396 = vshrl.u32 %v395, 7
    %v397 = vsub.s32 0, %v396
    %v398 = vrot.slane %v393, %v397
    %400 = vmatprep.subr.mxu0 0.0
    %401 = vmatpush1.msra.mxu0 %v377
    %402 = vmatprep.subr.mxu0 0.0
    %403 = vmatpush1.msra.mxu0 %v378
    %404 = vmatprep.subr.mxu0 0.0
    %405 = vmatpush1.msra.mxu0 %v379
    %406 = vmatprep.subr.mxu0 0.0
    %407 = vmatpush1.msra.mxu0 %v380
    %408 = vmatprep.subr.mxu0 0.0
    %409 = vmatpush1.msra.mxu0 %v381
    %410 = vmatprep.subr.mxu0 0.0
    %411 = vmatpush1.msra.mxu0 %v382
    %412 = vmatprep.subr.mxu0 0.0
    %413 = vmatpush1.msra.mxu0 %v383
    %414 = vmatprep.subr.mxu0 0.0
    %415 = vmatpush1.msra.mxu0 %v384
    %416 = vmatprep.subr.mxu0 0.0
    %417 = vmatpush1.msra.mxu0 %v385
    %418 = vmatprep.subr.mxu0 0.0
    %419 = vmatpush1.msra.mxu0 %v386
    %420 = vmatprep.subr.mxu0 0.0
    %421 = vmatpush1.msra.mxu0 %v387
    %422 = vmatprep.subr.mxu0 0.0
    %423 = vmatpush1.msra.mxu0 %v388
    %424 = vmatprep.subr.mxu0 0.0
    %425 = vmatpush1.msra.mxu0 %v389
    %426 = vmatprep.subr.mxu0 0.0
    %427 = vmatpush1.msra.mxu0 %v390
    %428 = vmatprep.subr.mxu0 0.0
    %429 = vmatpush1.msra.mxu0 %v391
    %430 = vmatprep.subr.mxu0 0.0
    %431 = vmatpush1.msra.mxu0 %v392
    %432 = vmatprep.subr.mxu0 0.0
    %433 = vmatpush1.msra.mxu0 0.0
    %434 = vmatprep.subr.mxu0 0.0
    %435 = vmatpush1.msra.mxu0 0.0
    %436 = vmatprep.subr.mxu0 0.0
    %437 = vmatpush1.msra.mxu0 0.0
    %438 = vmatprep.subr.mxu0 0.0
    %439 = vmatpush1.msra.mxu0 0.0
    %440 = vmatprep.subr.mxu0 0.0
    %441 = vmatpush1.msra.mxu0 0.0
    %442 = vmatprep.subr.mxu0 0.0
    %443 = vmatpush1.msra.mxu0 0.0
    %444 = vmatprep.subr.mxu0 0.0
    %445 = vmatpush1.msra.mxu0 0.0
    %446 = vmatprep.subr.mxu0 0.0
    %447 = vmatpush1.msra.mxu0 0.0
    %448 = vmatprep.subr.mxu0 0.0
    %449 = vmatpush1.msra.mxu0 0.0
    %450 = vmatprep.subr.mxu0 0.0
    %451 = vmatpush1.msra.mxu0 0.0
    %452 = vmatprep.subr.mxu0 0.0
    %453 = vmatpush1.msra.mxu0 0.0
    %454 = vmatprep.subr.mxu0 0.0
    %455 = vmatpush1.msra.mxu0 0.0
    %456 = vmatprep.subr.mxu0 0.0
    %457 = vmatpush1.msra.mxu0 0.0
    %458 = vmatprep.subr.mxu0 0.0
    %459 = vmatpush1.msra.mxu0 0.0
    %460 = vmatprep.subr.mxu0 0.0
    %461 = vmatpush1.msra.mxu0 0.0
    %462 = vmatprep.subr.mxu0 0.0
    %463 = vmatpush1.msra.mxu0 0.0
    %464 = vmatprep.mubr.f32.mxu0 0.0
    %465 = vmatmul.mubr.f32.gmra.mrb[0].mxu0 %v125
    %v466 = vpop.f32.mrb[0].mxu0
    %v467 = vadd.f32 %v398, %v466
    %v468 = vpop.f32.mrb[0].mxu0
    %469 = vdwg.mxu0
    %v470 = vmax.f32 %v467, 0.0
    %v471 = vld [vmem:[%s8] sm:$0xff]
    %v472 = vld [vmem:[%s8 + $0x8] sm:$0xff]
    %v473 = vld [vmem:[%s8 + $0x10] sm:$0xff]
    %v474 = vld [vmem:[%s8 + $0x18] sm:$0xff]
    %v475 = vld [vmem:[%s9] sm:$0x1]
    %v477 = vlaneseq
    %v478 = vshrl.u32 %v477, 7
    %v479 = vsub.s32 0, %v478
    %v480 = vrot.slane %v475, %v479
    %v483 = vsel %vm303, %v470, 0
    %485 = vmatprep.subr.mxu0 0.0
    %486 = vmatpush1.msra.mxu0 %v471
    %487 = vmatprep.subr.mxu0 0.0
    %488 = vmatpush1.msra.mxu0 %v472
    %489 = vmatprep.subr.mxu0 0.0
    %490 = vmatpush1.msra.mxu0 %v473
    %491 = vmatprep.subr.mxu0 0.0
    %492 = vmatpush1.msra.mxu0 %v474
    %493 = vmatprep.subr.mxu0 0.0
    %494 = vmatpush1.msra.mxu0 0.0
    %495 = vmatprep.subr.mxu0 0.0
    %496 = vmatpush1.msra.mxu0 0.0
    %497 = vmatprep.subr.mxu0 0.0
    %498 = vmatpush1.msra.mxu0 0.0
    %499 = vmatprep.subr.mxu0 0.0
    %500 = vmatpush1.msra.mxu0 0.0
    %501 = vmatprep.subr.mxu0 0.0
    %502 = vmatpush1.msra.mxu0 0.0
    %503 = vmatprep.subr.mxu0 0.0
    %504 = vmatpush1.msra.mxu0 0.0
    %505 = vmatprep.subr.mxu0 0.0
    %506 = vmatpush1.msra.mxu0 0.0
    %507 = vmatprep.subr.mxu0 0.0
    %508 = vmatpush1.msra.mxu0 0.0
    %509 = vmatprep.subr.mxu0 0.0
    %510 = vmatpush1.msra.mxu0 0.0
    %511 = vmatprep.subr.mxu0 0.0
    %512 = vmatpush1.msra.mxu0 0.0
    %513 = vmatprep.subr.mxu0 0.0
    %514 = vmatpush1.msra.mxu0 0.0
    %515 = vmatprep.subr.mxu0 0.0
    %516 = vmatpush1.msra.mxu0 0.0
    %517 = vmatprep.subr.mxu0 0.0
    %518 = vmatpush1.msra.mxu0 0.0
    %519 = vmatprep.subr.mxu0 0.0
    %520 = vmatpush1.msra.mxu0 0.0
    %521 = vmatprep.subr.mxu0 0.0
    %522 = vmatpush1.msra.mxu0 0.0
    %523 = vmatprep.subr.mxu0 0.0
    %524 = vmatpush1.msra.mxu0 0.0
    %525 = vmatprep.subr.mxu0 0.0
    %526 = vmatpush1.msra.mxu0 0.0
    %527 = vmatprep.subr.mxu0 0.0
    %528 = vmatpush1.msra.mxu0 0.0
    %529 = vmatprep.subr.mxu0 0.0
    %530 = vmatpush1.msra.mxu0 0.0
    %531 = vmatprep.subr.mxu0 0.0
    %532 = vmatpush1.msra.mxu0 0.0
    %533 = vmatprep.subr.mxu0 0.0
    %534 = vmatpush1.msra.mxu0 0.0
    %535 = vmatprep.subr.mxu0 0.0
    %536 = vmatpush1.msra.mxu0 0.0
    %537 = vmatprep.subr.mxu0 0.0
    %538 = vmatpush1.msra.mxu0 0.0
    %539 = vmatprep.subr.mxu0 0.0
    %540 = vmatpush1.msra.mxu0 0.0
    %541 = vmatprep.subr.mxu0 0.0
    %542 = vmatpush1.msra.mxu0 0.0
    %543 = vmatprep.subr.mxu0 0.0
    %544 = vmatpush1.msra.mxu0 0.0
    %545 = vmatprep.subr.mxu0 0.0
    %546 = vmatpush1.msra.mxu0 0.0
    %547 = vmatprep.subr.mxu0 0.0
    %548 = vmatpush1.msra.mxu0 0.0
    %549 = vmatprep.mubr.f32.mxu0 0.0
    %550 = vmatmul.mubr.f32.gmra.mrb[0].mxu0 %v483
    %v551 = vpop.f32.mrb[0].mxu0
    %v552 = vadd.f32 %v480, %v551
    %v553 = vpop.f32.mrb[0].mxu0
    %554 = vdwg.mxu0
    %v556 = vsel %vm303, %v374, 0
    %v559 = vsel %vm303, %v552, 0
    %561 = vmatprep.subr.mxu0 0.0
    %562 = vmatpush1.xpose.msra.mxu0 %v559
    %563 = vmatprep.subr.mxu0 0.0
    %564 = vmatpush1.xpose.msra.mxu0 0.0
    %565 = vmatprep.subr.mxu0 0.0
    %566 = vmatpush1.xpose.msra.mxu0 0.0
    %567 = vmatprep.subr.mxu0 0.0
    %568 = vmatpush1.xpose.msra.mxu0 0.0
    %569 = vmatprep.subr.mxu0 0.0
    %570 = vmatpush1.xpose.msra.mxu0 0.0
    %571 = vmatprep.subr.mxu0 0.0
    %572 = vmatpush1.xpose.msra.mxu0 0.0
    %573 = vmatprep.subr.mxu0 0.0
    %574 = vmatpush1.xpose.msra.mxu0 0.0
    %575 = vmatprep.subr.mxu0 0.0
    %576 = vmatpush1.xpose.msra.mxu0 0.0
    %577 = vmatprep.subr.mxu0 0.0
    %578 = vmatpush1.xpose.msra.mxu0 0.0
    %579 = vmatprep.subr.mxu0 0.0
    %580 = vmatpush1.xpose.msra.mxu0 0.0
    %581 = vmatprep.subr.mxu0 0.0
    %582 = vmatpush1.xpose.msra.mxu0 0.0
    %583 = vmatprep.subr.mxu0 0.0
    %584 = vmatpush1.xpose.msra.mxu0 0.0
    %585 = vmatprep.subr.mxu0 0.0
    %586 = vmatpush1.xpose.msra.mxu0 0.0
    %587 = vmatprep.subr.mxu0 0.0
    %588 = vmatpush1.xpose.msra.mxu0 0.0
    %589 = vmatprep.subr.mxu0 0.0
    %590 = vmatpush1.xpose.msra.mxu0 0.0
    %591 = vmatprep.subr.mxu0 0.0
    %592 = vmatpush1.xpose.msra.mxu0 0.0
    %593 = vmatprep.subr.mxu0 0.0
    %594 = vmatpush1.xpose.msra.mxu0 0.0
    %595 = vmatprep.subr.mxu0 0.0
    %596 = vmatpush1.xpose.msra.mxu0 0.0
    %597 = vmatprep.subr.mxu0 0.0
    %598 = vmatpush1.xpose.msra.mxu0 0.0
    %599 = vmatprep.subr.mxu0 0.0
    %600 = vmatpush1.xpose.msra.mxu0 0.0
    %601 = vmatprep.subr.mxu0 0.0
    %602 = vmatpush1.xpose.msra.mxu0 0.0
    %603 = vmatprep.subr.mxu0 0.0
    %604 = vmatpush1.xpose.msra.mxu0 0.0
    %605 = vmatprep.subr.mxu0 0.0
    %606 = vmatpush1.xpose.msra.mxu0 0.0
    %607 = vmatprep.subr.mxu0 0.0
    %608 = vmatpush1.xpose.msra.mxu0 0.0
    %609 = vmatprep.subr.mxu0 0.0
    %610 = vmatpush1.xpose.msra.mxu0 0.0
    %611 = vmatprep.subr.mxu0 0.0
    %612 = vmatpush1.xpose.msra.mxu0 0.0
    %613 = vmatprep.subr.mxu0 0.0
    %614 = vmatpush1.xpose.msra.mxu0 0.0
    %615 = vmatprep.subr.mxu0 0.0
    %616 = vmatpush1.xpose.msra.mxu0 0.0
    %617 = vmatprep.subr.mxu0 0.0
    %618 = vmatpush1.xpose.msra.mxu0 0.0
    %619 = vmatprep.subr.mxu0 0.0
    %620 = vmatpush1.xpose.msra.mxu0 0.0
    %621 = vmatprep.subr.mxu0 0.0
    %622 = vmatpush1.xpose.msra.mxu0 0.0
    %623 = vmatprep.subr.mxu0 0.0
    %624 = vmatpush1.xpose.msra.mxu0 0.0
    %625 = vmatprep.mubr.f32.mxu0 0.0
    %626 = vmatmul.mubr.f32.gmra.mrb[0].mxu0 %v556
    %v627 = vpop.f32.mrb[0].mxu0
    %v628 = vadd.f32 0.0, %v627
    %v629 = vpop.f32.mrb[0].mxu0
    %630 = vdwg.mxu0
    %v631 = vadd.f32 %v197, %v628
    %v632 = vmul.f32 %v631, 0.5
    %v633 = vld [vmem:[%s10] sm:$0xf]
    %v634 = vmax.f32 %v632, 0.0
    %v635 = vand.u32 2147483647, %v632
    %v636 = vsub.f32 0.0, %v635
    %v637 = vmul.f32 %v636, 1.442695
    %v638 = vpow.pop %v637
    %v639 = vadd.f32 %v638, 1.0
    %v640 = vlog2.pop %v639
    %v641 = vmul.f32 %v640, 0.6931472
    %v642 = vmul.f32 -0.5, %v638
    %v643 = vadd.f32 %v642, 1.0
    %v644 = vmul.f32 %v643, %v638
    %v645 = vand.u32 2147483647, %v638
    %vm646 = vcmp.lt.f32.partialorder %v645, 0.0004427343
    %v647 = vsel %vm646, %v644, %v641
    %v648 = vadd.f32 %v634, %v647
    %v649 = vsub.f32 %v648, %v632
    %v650 = vsub.f32 0.0, %v649
    %v651 = vmul.f32 %v650, 1.442695
    %v652 = vpow.pop %v651
    %vm653 = vcmask 60416
    %654 = vst.msk [vmem:[%s11] sm:$0xf] %vm653, %v652
    %v655 = vmul.f32 %v633, 20.0
    %v656 = vmul.f32 %v655, %v649
    %v657 = vsub.f32 1.0, %v633
    %v658 = vmul.f32 %v657, %v648
    %v659 = vadd.f32 %v656, %v658
    %v660 = vsel %vm653, %v659, 0.0
    %661 = vadd.xlane.f32.xlu0 %v660
    %v662 = vpop.xlane.xlu0 %661
    %v663 = vrot.slane %v662, 4
    %v664 = vadd.f32 %v662, %v663
    %v665 = vrot.slane %v664, 2
    %v666 = vadd.f32 %v664, %v665
    %v667 = vrot.slane %v666, 1
    %v668 = vadd.f32 %v666, %v667
    %s669 = vtos %v668
    %v670 = vrcp.pop 32.0
    %s671 = vtos %v670
    %s672 = smul.f32 %s669, %s671
    %v673 = vstv %s672
    %vm674 = vcmask 0
    %675 = vst.msk [vmem:[#allocation2] sm:$0x1] %vm674, %v673
    // Predicated region
    $region46: #{my_model_forward.3} parent=1 // pred_check
      _
    $region47: #{my_model_forward.3} parent=1 // pred_check_branch
      %677 = sbr.rel (0) target = $region49
    $region48: #{my_model_forward.3} parent=1 // pred_region
      _
    $region49: #{my_model_forward.3} parent=1 // pred_fallthru
      _
    // Predicated region
    $region50: #{my_model_forward.3} parent=1 // pred_check
      _
    $region51: #{my_model_forward.3} parent=1 // pred_check_branch
      %679 = sbr.rel (0) target = $region53
    $region52: #{my_model_forward.3} parent=1 // pred_region
      %s681 = ssub.s32 16, 16
      %682 = vsyncadd [#allocation3], %s681
      %s684 = sshll.u32 [#allocation2], 4
      %s685 = int_to_ptr.vmem [resolvable:$true] %s684
      %687 = dma.vmem_to_hbm [thread:$0]  %s685, 16, %s12, [#allocation3]
    $region53: #{my_model_forward.3} parent=1 // pred_fallthru
      _
    // Predicated region
    $region54: #{my_model_forward.3} parent=1 // pred_check
      _
    $region55: #{my_model_forward.3} parent=1 // pred_check_branch
      %689 = sbr.rel (0) target = $region57
    $region56: #{my_model_forward.3} parent=1 // pred_region
      _
    $region57: #{my_model_forward.3} parent=1 // pred_fallthru
      _
    // Predicated region
    $region58: #{my_model_forward.3} parent=1 // pred_check
      _
    $region59: #{my_model_forward.3} parent=1 // pred_check_branch
      %691 = sbr.rel (0) target = $region61
    $region60: #{my_model_forward.3} parent=1 // pred_region
      %692 = dma.done [#allocation3], 16
    $region61: #{my_model_forward.3} parent=1 // pred_fallthru
      _
    %693 = vsyncpa [#allocation3], 1

// kernel: my_model_forward.2
$region0: #{my_model_forward.2}
  #allocation0 [shape = 'u32[]', space=smem, size = 0x4, offset = 0x4, fixed_abs, tag = 'smem constant byte address 0x4 - core index']
  #allocation1 [shape = 'u32[144,128]{1,0:T(1,128)}', space=vmem, size = 0x12000, scoped, tag = 'internal scratch']
  %s0 = inlined_call_operand.hbm [shape: f32[4,3], index: 0, kind: input, shape index: {}]
  %s1 = inlined_call_operand.hbm [shape: f32[4,16,16], index: 1, kind: input, shape index: {}]
  %s2 = inlined_call_operand.hbm [shape: f32[4,16,16], index: 2, kind: input, shape index: {}]
  %s3 = inlined_call_operand.hbm [shape: f32[4,16,32], index: 3, kind: input, shape index: {}]
  %s4 = inlined_call_operand.hbm [shape: f32[4,1,32], index: 4, kind: input, shape index: {}]
  %s5 = inlined_call_operand.hbm [shape: f32[4,1,32], index: 5, kind: input, shape index: {}]
  %s6 = inlined_call_operand.hbm [shape: f32[4,1,32], index: 6, kind: input, shape index: {}]
  %s7 = inlined_call_operand.hbm [shape: f32[4,32,32], index: 7, kind: input, shape index: {}]
  %s8 = inlined_call_operand.hbm [shape: f32[4,1,32], index: 8, kind: input, shape index: {}]
  %s9 = inlined_call_operand.hbm [shape: f32[4,1,32], index: 9, kind: input, shape index: {}]
  %s10 = inlined_call_operand.hbm [shape: f32[4,1,32], index: 10, kind: input, shape index: {}]
  %s11 = inlined_call_operand.hbm [shape: f32[4,32,32], index: 11, kind: input, shape index: {}]
  %s12 = inlined_call_operand.hbm [shape: f32[4,1,32], index: 12, kind: input, shape index: {}]
  %s13 = inlined_call_operand.hbm [shape: f32[4,1,32], index: 13, kind: input, shape index: {}]
  %s14 = inlined_call_operand.hbm [shape: f32[4,1,32], index: 14, kind: input, shape index: {}]
  %s15 = inlined_call_operand.hbm [shape: f32[4,16,32], index: 15, kind: output, shape index: {}]
  %s16 = sld [smem:[#allocation0]]
  $region153: #{my_model_forward.2} parent=0
    _
  %s18 = ssub.s32 1, %s16
  %s19 = scalar_select 0, %s18, %s16
  $region1: #{my_model_forward.2} parent=0
    #allocation2 [shape = 'u8[2048]{0}', space=smem, size = 0x800, scoped, tag = 'input window, operand 0, single buffered']
    #allocation3 [shape = 's32[2]{0}', space=sflag, size = 0x8, scoped, tag = 'scoped memory for my_model_forward.2']
    #allocation4 [shape = 's32[2]{0}', space=sflag, size = 0x8, scoped, tag = 'scoped memory for my_model_forward.2']
    #allocation5 [shape = 's32[2]{0}', space=sflag, size = 0x8, scoped, tag = 'scoped memory for my_model_forward.2']
    #allocation6 [shape = 'u8[16384]{0}', space=vmem, size = 0x4000, scoped, tag = 'input window, operand 1']
    #allocation7 [shape = 'u8[16384]{0}', space=vmem, size = 0x4000, scoped, tag = 'input window, operand 2']
    #allocation8 [shape = 's32[2]{0}', space=sflag, size = 0x8, scoped, tag = 'scoped memory for my_model_forward.2']
    #allocation9 [shape = 'u8[16384]{0}', space=vmem, size = 0x4000, scoped, tag = 'input window, operand 3']
    #allocation10 [shape = 'u8[1024]{0}', space=vmem, size = 0x400, scoped, tag = 'input window, operand 4']
    #allocation11 [shape = 's32[2]{0}', space=sflag, size = 0x8, scoped, tag = 'scoped memory for my_model_forward.2']
    #allocation12 [shape = 'u8[1024]{0}', space=vmem, size = 0x400, scoped, tag = 'input window, operand 5']
    #allocation13 [shape = 'u8[1024]{0}', space=vmem, size = 0x400, scoped, tag = 'input window, operand 6']
    #allocation14 [shape = 's32[2]{0}', space=sflag, size = 0x8, scoped, tag = 'scoped memory for my_model_forward.2']
    #allocation15 [shape = 'u8[32768]{0}', space=vmem, size = 0x8000, scoped, tag = 'input window, operand 7']
    #allocation16 [shape = 'u8[1024]{0}', space=vmem, size = 0x400, scoped, tag = 'input window, operand 8']
    #allocation17 [shape = 's32[2]{0}', space=sflag, size = 0x8, scoped, tag = 'scoped memory for my_model_forward.2']
    #allocation18 [shape = 'u8[1024]{0}', space=vmem, size = 0x400, scoped, tag = 'input window, operand 9']
    #allocation19 [shape = 'u8[1024]{0}', space=vmem, size = 0x400, scoped, tag = 'input window, operand 10']
    #allocation20 [shape = 's32[2]{0}', space=sflag, size = 0x8, scoped, tag = 'scoped memory for my_model_forward.2']
    #allocation21 [shape = 'u8[32768]{0}', space=vmem, size = 0x8000, scoped, tag = 'input window, operand 11']
    #allocation22 [shape = 'u8[1024]{0}', space=vmem, size = 0x400, scoped, tag = 'input window, operand 12']
    #allocation23 [shape = 's32[2]{0}', space=sflag, size = 0x8, scoped, tag = 'scoped memory for my_model_forward.2']
    #allocation24 [shape = 'u8[1024]{0}', space=vmem, size = 0x400, scoped, tag = 'input window, operand 13']
    #allocation25 [shape = 'u8[1024]{0}', space=vmem, size = 0x400, scoped, tag = 'input window, operand 14']
    #allocation26 [shape = 's32[2]{0}', space=sflag, size = 0x8, scoped, tag = 'scoped memory for my_model_forward.2']
    #allocation27 [shape = 'u8[16384]{0}', space=vmem, size = 0x4000, scoped, tag = 'output window, operand 0']
    %20 = vsyncpa [#allocation5], 0
    %21 = vsyncpa [#allocation3], 0
    %s22 = scalar_lea.sflag [#allocation3], 1
    %23 = vsyncpa %s22, 0
    %24 = vsyncpa [#allocation8], 0
    %s25 = scalar_lea.sflag [#allocation8], 1
    %26 = vsyncpa %s25, 0
    %27 = vsyncpa [#allocation11], 0
    %s28 = scalar_lea.sflag [#allocation11], 1
    %29 = vsyncpa %s28, 0
    %30 = vsyncpa [#allocation14], 0
    %s31 = scalar_lea.sflag [#allocation14], 1
    %32 = vsyncpa %s31, 0
    %33 = vsyncpa [#allocation17], 0
    %s34 = scalar_lea.sflag [#allocation17], 1
    %35 = vsyncpa %s34, 0
    %36 = vsyncpa [#allocation20], 0
    %s37 = scalar_lea.sflag [#allocation20], 1
    %38 = vsyncpa %s37, 0
    %39 = vsyncpa [#allocation23], 0
    %s40 = scalar_lea.sflag [#allocation23], 1
    %41 = vsyncpa %s40, 0
    %42 = vsyncpa [#allocation26], 0
    %s43 = scalar_lea.sflag [#allocation26], 1
    %44 = vsyncpa %s43, 0
    %45 = vsyncpa [#allocation4], 0
    %s46 = scalar_lea.sflag [#allocation4], 1
    %47 = vsyncpa %s46, 0
    loop: start=0, step=1, limit=6
    $region2: #{my_model_forward.2} parent=1 // loop_pre_header
      _
    $region3: #{my_model_forward.2} parent=1 // loop_header
      %s49 = sphi 0, %s53
      %p50 = scmp.ge.s32.totalorder %s49, 6
      %s57 = sphi 0, %s57
      %s59 = sphi 0, %s57
      %s60 = sphi 0, %s59
      %s74 = sphi 0, %s60
      %s80 = sphi 0, %s82
      %s83 = sphi 0, %s80
      %s84 = sphi 0, %s83
      %s100 = sphi 0, %s84
      %s106 = sphi 0, %s108
      %s109 = sphi 0, %s106
      %s110 = sphi 0, %s109
      %s126 = sphi 0, %s110
      %s132 = sphi 0, %s134
      %s135 = sphi 0, %s132
      %s136 = sphi 0, %s135
      %s152 = sphi 0, %s136
      %s158 = sphi 0, %s160
      %s161 = sphi 0, %s158
      %s162 = sphi 0, %s161
      %s178 = sphi 0, %s162
      %s184 = sphi 0, %s186
      %s187 = sphi 0, %s184
      %s188 = sphi 0, %s187
      %s204 = sphi 0, %s188
      %s210 = sphi 0, %s212
      %s213 = sphi 0, %s210
      %s214 = sphi 0, %s213
      %s230 = sphi 0, %s214
      %s236 = sphi 0, %s238
      %s239 = sphi 0, %s236
      %s240 = sphi 0, %s239
      %s256 = sphi 0, %s240
      %s262 = sphi 0, %s264
      %s265 = sphi 0, %s262
      %s266 = sphi 0, %s265
      %s282 = sphi 0, %s266
      %s288 = sphi 0, %s290
      %s291 = sphi 0, %s288
      %s292 = sphi 0, %s291
      %s308 = sphi 0, %s292
      %s314 = sphi 0, %s316
      %s317 = sphi 0, %s314
      %s318 = sphi 0, %s317
      %s334 = sphi 0, %s318
      %s340 = sphi 0, %s342
      %s343 = sphi 0, %s340
      %s344 = sphi 0, %s343
      %s360 = sphi 0, %s344
      %s366 = sphi 0, %s368
      %s369 = sphi 0, %s366
      %s370 = sphi 0, %s369
      %s386 = sphi 0, %s370
      %s392 = sphi 0, %s394
      %s395 = sphi 0, %s392
      %s396 = sphi 0, %s395
      %s412 = sphi 0, %s396
      %s418 = sphi 0, %s420
      %s421 = sphi 0, %s418
      %s422 = sphi 0, %s421
      %s438 = sphi 0, %s422
      %s444 = sphi 0, %s446
      %s447 = sphi 0, %s444
      %s448 = sphi 0, %s447
      %s464 = sphi 0, %s448
    $region4: #{my_model_forward.2} parent=1 // loop_header_branch
      %52 = sbr.rel (%p50) target = $region8
    $region5: #{my_model_forward.2} parent=1 // loop_body
      %s54 = ssub.s32 %s49, 1
      %s55 = ssub.s32 %s49, 2
      %s56 = sadd.s32 %s49, 1
      %s58 = sadd.s32 %s57, 1
      %p61 = scmp.eq.s32.totalorder %s49, 3
      %p62 = scmp.ne.s32.totalorder %s57, %s59
      %p63 = scmp.eq.s32.totalorder %s49, 0
      %p64 = por %p62, %p63
      %p65 = scmp.ne.s32.totalorder %s57, %s59
      %p66 = scmp.eq.s32.totalorder %s54, 3
      %p67 = por %p65, %p66
      %p68 = scmp.ne.s32.totalorder %s59, %s60
      %p69 = scmp.eq.s32.totalorder %s54, 0
      %p70 = por %p68, %p69
      %p71 = scmp.ne.s32.totalorder %s59, %s60
      %p72 = scmp.eq.s32.totalorder %s55, 3
      %p73 = por %p71, %p72
      %p75 = scmp.ne.s32.totalorder %s60, %s74
      %p76 = scmp.eq.s32.totalorder %s55, 0
      %p77 = por %p75, %p76
      %s78 = ssub.s32 %s49, %s56
      %p79 = scmp.eq.s32.totalorder %s78, 0
      %s81 = sadd.s32 %s80, 1
      %s82 = scalar_select %p79, %s80, %s81
      %p85 = pneg %p79
      %p86 = scmp.eq.s32.totalorder %s49, 3
      %p87 = por %p85, %p86
      %p88 = scmp.ne.s32.totalorder %s80, %s83
      %p89 = scmp.eq.s32.totalorder %s49, 0
      %p90 = por %p88, %p89
      %p91 = scmp.ne.s32.totalorder %s80, %s83
      %p92 = scmp.eq.s32.totalorder %s54, 3
      %p93 = por %p91, %p92
      %p94 = scmp.ne.s32.totalorder %s83, %s84
      %p95 = scmp.eq.s32.totalorder %s54, 0
      %p96 = por %p94, %p95
      %p97 = scmp.ne.s32.totalorder %s83, %s84
      %p98 = scmp.eq.s32.totalorder %s55, 3
      %p99 = por %p97, %p98
      %p101 = scmp.ne.s32.totalorder %s84, %s100
      %p102 = scmp.eq.s32.totalorder %s55, 0
      %p103 = por %p101, %p102
      %s104 = ssub.s32 %s49, %s56
      %p105 = scmp.eq.s32.totalorder %s104, 0
      %s107 = sadd.s32 %s106, 1
      %s108 = scalar_select %p105, %s106, %s107
      %p111 = pneg %p105
      %p112 = scmp.eq.s32.totalorder %s49, 3
      %p113 = por %p111, %p112
      %p114 = scmp.ne.s32.totalorder %s106, %s109
      %p115 = scmp.eq.s32.totalorder %s49, 0
      %p116 = por %p114, %p115
      %p117 = scmp.ne.s32.totalorder %s106, %s109
      %p118 = scmp.eq.s32.totalorder %s54, 3
      %p119 = por %p117, %p118
      %p120 = scmp.ne.s32.totalorder %s109, %s110
      %p121 = scmp.eq.s32.totalorder %s54, 0
      %p122 = por %p120, %p121
      %p123 = scmp.ne.s32.totalorder %s109, %s110
      %p124 = scmp.eq.s32.totalorder %s55, 3
      %p125 = por %p123, %p124
      %p127 = scmp.ne.s32.totalorder %s110, %s126
      %p128 = scmp.eq.s32.totalorder %s55, 0
      %p129 = por %p127, %p128
      %s130 = ssub.s32 %s49, %s56
      %p131 = scmp.eq.s32.totalorder %s130, 0
      %s133 = sadd.s32 %s132, 1
      %s134 = scalar_select %p131, %s132, %s133
      %p137 = pneg %p131
      %p138 = scmp.eq.s32.totalorder %s49, 3
      %p139 = por %p137, %p138
      %p140 = scmp.ne.s32.totalorder %s132, %s135
      %p141 = scmp.eq.s32.totalorder %s49, 0
      %p142 = por %p140, %p141
      %p143 = scmp.ne.s32.totalorder %s132, %s135
      %p144 = scmp.eq.s32.totalorder %s54, 3
      %p145 = por %p143, %p144
      %p146 = scmp.ne.s32.totalorder %s135, %s136
      %p147 = scmp.eq.s32.totalorder %s54, 0
      %p148 = por %p146, %p147
      %p149 = scmp.ne.s32.totalorder %s135, %s136
      %p150 = scmp.eq.s32.totalorder %s55, 3
      %p151 = por %p149, %p150
      %p153 = scmp.ne.s32.totalorder %s136, %s152
      %p154 = scmp.eq.s32.totalorder %s55, 0
      %p155 = por %p153, %p154
      %s156 = ssub.s32 %s49, %s56
      %p157 = scmp.eq.s32.totalorder %s156, 0
      %s159 = sadd.s32 %s158, 1
      %s160 = scalar_select %p157, %s158, %s159
      %p163 = pneg %p157
      %p164 = scmp.eq.s32.totalorder %s49, 3
      %p165 = por %p163, %p164
      %p166 = scmp.ne.s32.totalorder %s158, %s161
      %p167 = scmp.eq.s32.totalorder %s49, 0
      %p168 = por %p166, %p167
      %p169 = scmp.ne.s32.totalorder %s158, %s161
      %p170 = scmp.eq.s32.totalorder %s54, 3
      %p171 = por %p169, %p170
      %p172 = scmp.ne.s32.totalorder %s161, %s162
      %p173 = scmp.eq.s32.totalorder %s54, 0
      %p174 = por %p172, %p173
      %p175 = scmp.ne.s32.totalorder %s161, %s162
      %p176 = scmp.eq.s32.totalorder %s55, 3
      %p177 = por %p175, %p176
      %p179 = scmp.ne.s32.totalorder %s162, %s178
      %p180 = scmp.eq.s32.totalorder %s55, 0
      %p181 = por %p179, %p180
      %s182 = ssub.s32 %s49, %s56
      %p183 = scmp.eq.s32.totalorder %s182, 0
      %s185 = sadd.s32 %s184, 1
      %s186 = scalar_select %p183, %s184, %s185
      %p189 = pneg %p183
      %p190 = scmp.eq.s32.totalorder %s49, 3
      %p191 = por %p189, %p190
      %p192 = scmp.ne.s32.totalorder %s184, %s187
      %p193 = scmp.eq.s32.totalorder %s49, 0
      %p194 = por %p192, %p193
      %p195 = scmp.ne.s32.totalorder %s184, %s187
      %p196 = scmp.eq.s32.totalorder %s54, 3
      %p197 = por %p195, %p196
      %p198 = scmp.ne.s32.totalorder %s187, %s188
      %p199 = scmp.eq.s32.totalorder %s54, 0
      %p200 = por %p198, %p199
      %p201 = scmp.ne.s32.totalorder %s187, %s188
      %p202 = scmp.eq.s32.totalorder %s55, 3
      %p203 = por %p201, %p202
      %p205 = scmp.ne.s32.totalorder %s188, %s204
      %p206 = scmp.eq.s32.totalorder %s55, 0
      %p207 = por %p205, %p206
      %s208 = ssub.s32 %s49, %s56
      %p209 = scmp.eq.s32.totalorder %s208, 0
      %s211 = sadd.s32 %s210, 1
      %s212 = scalar_select %p209, %s210, %s211
      %p215 = pneg %p209
      %p216 = scmp.eq.s32.totalorder %s49, 3
      %p217 = por %p215, %p216
      %p218 = scmp.ne.s32.totalorder %s210, %s213
      %p219 = scmp.eq.s32.totalorder %s49, 0
      %p220 = por %p218, %p219
      %p221 = scmp.ne.s32.totalorder %s210, %s213
      %p222 = scmp.eq.s32.totalorder %s54, 3
      %p223 = por %p221, %p222
      %p224 = scmp.ne.s32.totalorder %s213, %s214
      %p225 = scmp.eq.s32.totalorder %s54, 0
      %p226 = por %p224, %p225
      %p227 = scmp.ne.s32.totalorder %s213, %s214
      %p228 = scmp.eq.s32.totalorder %s55, 3
      %p229 = por %p227, %p228
      %p231 = scmp.ne.s32.totalorder %s214, %s230
      %p232 = scmp.eq.s32.totalorder %s55, 0
      %p233 = por %p231, %p232
      %s234 = ssub.s32 %s49, %s56
      %p235 = scmp.eq.s32.totalorder %s234, 0
      %s237 = sadd.s32 %s236, 1
      %s238 = scalar_select %p235, %s236, %s237
      %p241 = pneg %p235
      %p242 = scmp.eq.s32.totalorder %s49, 3
      %p243 = por %p241, %p242
      %p244 = scmp.ne.s32.totalorder %s236, %s239
      %p245 = scmp.eq.s32.totalorder %s49, 0
      %p246 = por %p244, %p245
      %p247 = scmp.ne.s32.totalorder %s236, %s239
      %p248 = scmp.eq.s32.totalorder %s54, 3
      %p249 = por %p247, %p248
      %p250 = scmp.ne.s32.totalorder %s239, %s240
      %p251 = scmp.eq.s32.totalorder %s54, 0
      %p252 = por %p250, %p251
      %p253 = scmp.ne.s32.totalorder %s239, %s240
      %p254 = scmp.eq.s32.totalorder %s55, 3
      %p255 = por %p253, %p254
      %p257 = scmp.ne.s32.totalorder %s240, %s256
      %p258 = scmp.eq.s32.totalorder %s55, 0
      %p259 = por %p257, %p258
      %s260 = ssub.s32 %s49, %s56
      %p261 = scmp.eq.s32.totalorder %s260, 0
      %s263 = sadd.s32 %s262, 1
      %s264 = scalar_select %p261, %s262, %s263
      %p267 = pneg %p261
      %p268 = scmp.eq.s32.totalorder %s49, 3
      %p269 = por %p267, %p268
      %p270 = scmp.ne.s32.totalorder %s262, %s265
      %p271 = scmp.eq.s32.totalorder %s49, 0
      %p272 = por %p270, %p271
      %p273 = scmp.ne.s32.totalorder %s262, %s265
      %p274 = scmp.eq.s32.totalorder %s54, 3
      %p275 = por %p273, %p274
      %p276 = scmp.ne.s32.totalorder %s265, %s266
      %p277 = scmp.eq.s32.totalorder %s54, 0
      %p278 = por %p276, %p277
      %p279 = scmp.ne.s32.totalorder %s265, %s266
      %p280 = scmp.eq.s32.totalorder %s55, 3
      %p281 = por %p279, %p280
      %p283 = scmp.ne.s32.totalorder %s266, %s282
      %p284 = scmp.eq.s32.totalorder %s55, 0
      %p285 = por %p283, %p284
      %s286 = ssub.s32 %s49, %s56
      %p287 = scmp.eq.s32.totalorder %s286, 0
      %s289 = sadd.s32 %s288, 1
      %s290 = scalar_select %p287, %s288, %s289
      %p293 = pneg %p287
      %p294 = scmp.eq.s32.totalorder %s49, 3
      %p295 = por %p293, %p294
      %p296 = scmp.ne.s32.totalorder %s288, %s291
      %p297 = scmp.eq.s32.totalorder %s49, 0
      %p298 = por %p296, %p297
      %p299 = scmp.ne.s32.totalorder %s288, %s291
      %p300 = scmp.eq.s32.totalorder %s54, 3
      %p301 = por %p299, %p300
      %p302 = scmp.ne.s32.totalorder %s291, %s292
      %p303 = scmp.eq.s32.totalorder %s54, 0
      %p304 = por %p302, %p303
      %p305 = scmp.ne.s32.totalorder %s291, %s292
      %p306 = scmp.eq.s32.totalorder %s55, 3
      %p307 = por %p305, %p306
      %p309 = scmp.ne.s32.totalorder %s292, %s308
      %p310 = scmp.eq.s32.totalorder %s55, 0
      %p311 = por %p309, %p310
      %s312 = ssub.s32 %s49, %s56
      %p313 = scmp.eq.s32.totalorder %s312, 0
      %s315 = sadd.s32 %s314, 1
      %s316 = scalar_select %p313, %s314, %s315
      %p319 = pneg %p313
      %p320 = scmp.eq.s32.totalorder %s49, 3
      %p321 = por %p319, %p320
      %p322 = scmp.ne.s32.totalorder %s314, %s317
      %p323 = scmp.eq.s32.totalorder %s49, 0
      %p324 = por %p322, %p323
      %p325 = scmp.ne.s32.totalorder %s314, %s317
      %p326 = scmp.eq.s32.totalorder %s54, 3
      %p327 = por %p325, %p326
      %p328 = scmp.ne.s32.totalorder %s317, %s318
      %p329 = scmp.eq.s32.totalorder %s54, 0
      %p330 = por %p328, %p329
      %p331 = scmp.ne.s32.totalorder %s317, %s318
      %p332 = scmp.eq.s32.totalorder %s55, 3
      %p333 = por %p331, %p332
      %p335 = scmp.ne.s32.totalorder %s318, %s334
      %p336 = scmp.eq.s32.totalorder %s55, 0
      %p337 = por %p335, %p336
      %s338 = ssub.s32 %s49, %s56
      %p339 = scmp.eq.s32.totalorder %s338, 0
      %s341 = sadd.s32 %s340, 1
      %s342 = scalar_select %p339, %s340, %s341
      %p345 = pneg %p339
      %p346 = scmp.eq.s32.totalorder %s49, 3
      %p347 = por %p345, %p346
      %p348 = scmp.ne.s32.totalorder %s340, %s343
      %p349 = scmp.eq.s32.totalorder %s49, 0
      %p350 = por %p348, %p349
      %p351 = scmp.ne.s32.totalorder %s340, %s343
      %p352 = scmp.eq.s32.totalorder %s54, 3
      %p353 = por %p351, %p352
      %p354 = scmp.ne.s32.totalorder %s343, %s344
      %p355 = scmp.eq.s32.totalorder %s54, 0
      %p356 = por %p354, %p355
      %p357 = scmp.ne.s32.totalorder %s343, %s344
      %p358 = scmp.eq.s32.totalorder %s55, 3
      %p359 = por %p357, %p358
      %p361 = scmp.ne.s32.totalorder %s344, %s360
      %p362 = scmp.eq.s32.totalorder %s55, 0
      %p363 = por %p361, %p362
      %s364 = ssub.s32 %s49, %s56
      %p365 = scmp.eq.s32.totalorder %s364, 0
      %s367 = sadd.s32 %s366, 1
      %s368 = scalar_select %p365, %s366, %s367
      %p371 = pneg %p365
      %p372 = scmp.eq.s32.totalorder %s49, 3
      %p373 = por %p371, %p372
      %p374 = scmp.ne.s32.totalorder %s366, %s369
      %p375 = scmp.eq.s32.totalorder %s49, 0
      %p376 = por %p374, %p375
      %p377 = scmp.ne.s32.totalorder %s366, %s369
      %p378 = scmp.eq.s32.totalorder %s54, 3
      %p379 = por %p377, %p378
      %p380 = scmp.ne.s32.totalorder %s369, %s370
      %p381 = scmp.eq.s32.totalorder %s54, 0
      %p382 = por %p380, %p381
      %p383 = scmp.ne.s32.totalorder %s369, %s370
      %p384 = scmp.eq.s32.totalorder %s55, 3
      %p385 = por %p383, %p384
      %p387 = scmp.ne.s32.totalorder %s370, %s386
      %p388 = scmp.eq.s32.totalorder %s55, 0
      %p389 = por %p387, %p388
      %s390 = ssub.s32 %s49, %s56
      %p391 = scmp.eq.s32.totalorder %s390, 0
      %s393 = sadd.s32 %s392, 1
      %s394 = scalar_select %p391, %s392, %s393
      %p397 = pneg %p391
      %p398 = scmp.eq.s32.totalorder %s49, 3
      %p399 = por %p397, %p398
      %p400 = scmp.ne.s32.totalorder %s392, %s395
      %p401 = scmp.eq.s32.totalorder %s49, 0
      %p402 = por %p400, %p401
      %p403 = scmp.ne.s32.totalorder %s392, %s395
      %p404 = scmp.eq.s32.totalorder %s54, 3
      %p405 = por %p403, %p404
      %p406 = scmp.ne.s32.totalorder %s395, %s396
      %p407 = scmp.eq.s32.totalorder %s54, 0
      %p408 = por %p406, %p407
      %p409 = scmp.ne.s32.totalorder %s395, %s396
      %p410 = scmp.eq.s32.totalorder %s55, 3
      %p411 = por %p409, %p410
      %p413 = scmp.ne.s32.totalorder %s396, %s412
      %p414 = scmp.eq.s32.totalorder %s55, 0
      %p415 = por %p413, %p414
      %s416 = ssub.s32 %s49, %s56
      %p417 = scmp.eq.s32.totalorder %s416, 0
      %s419 = sadd.s32 %s418, 1
      %s420 = scalar_select %p417, %s418, %s419
      %p423 = pneg %p417
      %p424 = scmp.eq.s32.totalorder %s49, 3
      %p425 = por %p423, %p424
      %p426 = scmp.ne.s32.totalorder %s418, %s421
      %p427 = scmp.eq.s32.totalorder %s49, 0
      %p428 = por %p426, %p427
      %p429 = scmp.ne.s32.totalorder %s418, %s421
      %p430 = scmp.eq.s32.totalorder %s54, 3
      %p431 = por %p429, %p430
      %p432 = scmp.ne.s32.totalorder %s421, %s422
      %p433 = scmp.eq.s32.totalorder %s54, 0
      %p434 = por %p432, %p433
      %p435 = scmp.ne.s32.totalorder %s421, %s422
      %p436 = scmp.eq.s32.totalorder %s55, 3
      %p437 = por %p435, %p436
      %p439 = scmp.ne.s32.totalorder %s422, %s438
      %p440 = scmp.eq.s32.totalorder %s55, 0
      %p441 = por %p439, %p440
      %s442 = ssub.s32 %s49, %s56
      %p443 = scmp.eq.s32.totalorder %s442, 0
      %s445 = sadd.s32 %s444, 1
      %s446 = scalar_select %p443, %s444, %s445
      %p449 = pneg %p443
      %p450 = scmp.eq.s32.totalorder %s49, 3
      %p451 = por %p449, %p450
      %p452 = scmp.ne.s32.totalorder %s444, %s447
      %p453 = scmp.eq.s32.totalorder %s49, 0
      %p454 = por %p452, %p453
      %p455 = scmp.ne.s32.totalorder %s444, %s447
      %p456 = scmp.eq.s32.totalorder %s54, 3
      %p457 = por %p455, %p456
      %p458 = scmp.ne.s32.totalorder %s447, %s448
      %p459 = scmp.eq.s32.totalorder %s54, 0
      %p460 = por %p458, %p459
      %p461 = scmp.ne.s32.totalorder %s447, %s448
      %p462 = scmp.eq.s32.totalorder %s55, 3
      %p463 = por %p461, %p462
      %p465 = scmp.ne.s32.totalorder %s448, %s464
      %p466 = scmp.eq.s32.totalorder %s55, 0
      %p467 = por %p465, %p466
      %p468 = scmp.le.s32.totalorder 1, %s49
      %p469 = scmp.lt.s32.totalorder %s49, 5
      %p470 = pnand %p468, %p469
      %p471 = pneg %p470
      // Predicated region
      $region9: #{my_model_forward.2} parent=5 // pred_check
        _
      $region10: #{my_model_forward.2} parent=5 // pred_check_branch
        %473 = sbr.rel (%p470) target = $region12
      $region11: #{my_model_forward.2} parent=5 // pred_region
        %s474 = ssub.s32 %s49, 1
        // Predicated region
        $region13: #{my_model_forward.2} parent=11 // pred_check
          %p475 = pneg %p70
        $region14: #{my_model_forward.2} parent=11 // pred_check_branch
          %477 = sbr.rel (%p475) target = $region16
        $region15: #{my_model_forward.2} parent=11 // pred_region
          %s479 = ssub.s32 64, 64
          %480 = vsyncadd [#allocation5], %s479
          %483 = dma.hbm_to_smem %s0, 64, [#allocation2], [#allocation5]
        $region16: #{my_model_forward.2} parent=11 // pred_fallthru
          _
      $region12: #{my_model_forward.2} parent=5 // pred_fallthru
        _
      %p484 = scmp.lt.s32.totalorder %s49, 4
      // Predicated region
      $region17: #{my_model_forward.2} parent=5 // pred_check
        %p485 = pneg %p484
      $region18: #{my_model_forward.2} parent=5 // pred_check_branch
        %487 = sbr.rel (%p485) target = $region20
      $region19: #{my_model_forward.2} parent=5 // pred_region
        // Predicated region
        $region21: #{my_model_forward.2} parent=19 // pred_check
          %p488 = pneg %p90
        $region22: #{my_model_forward.2} parent=19 // pred_check_branch
          %490 = sbr.rel (%p488) target = $region24
        $region23: #{my_model_forward.2} parent=19 // pred_region
          %s491 = sand.u32 %s80, 1
          %s492 = scalar_lea.sflag [#allocation3], %s491
          %s493 = sand.u32 %s80, 1
          %s494 = smul.addr %s493, 16
          %s495 = scalar_lea.vmem [#allocation6], %s494
          %s497 = ssub.s32 256, 256
          %498 = vsyncadd %s492, %s497
          %s499 = smul.addr %s49, 2
          %s500 = smul.addr %s499, 128
          %s501 = scalar_lea.hbm %s1, %s500
          %s502 = sshll.u32 %s495, 4
          %s503 = int_to_ptr.vmem [resolvable:$true] %s502
          %508 = dma.hbm_to_vmem [thread:$0]  %s501, 256, %s503, %s492, 128, 128, 8
        $region24: #{my_model_forward.2} parent=19 // pred_fallthru
          _
        // Predicated region
        $region25: #{my_model_forward.2} parent=19 // pred_check
          %p509 = pneg %p116
        $region26: #{my_model_forward.2} parent=19 // pred_check_branch
          %511 = sbr.rel (%p509) target = $region28
        $region27: #{my_model_forward.2} parent=19 // pred_region
          %s512 = sand.u32 %s49, 1
          %s513 = scalar_lea.sflag [#allocation8], %s512
          %s514 = sand.u32 %s106, 1
          %s515 = smul.addr %s514, 16
          %s516 = scalar_lea.vmem [#allocation7], %s515
          %s518 = ssub.s32 256, 256
          %519 = vsyncadd %s513, %s518
          %s520 = smul.addr %s49, 2
          %s521 = smul.addr %s520, 128
          %s522 = scalar_lea.hbm %s2, %s521
          %s523 = sshll.u32 %s516, 4
          %s524 = int_to_ptr.vmem [resolvable:$true] %s523
          %529 = dma.hbm_to_vmem [thread:$0]  %s522, 256, %s524, %s513, 128, 128, 8
        $region28: #{my_model_forward.2} parent=19 // pred_fallthru
          _
        // Predicated region
        $region29: #{my_model_forward.2} parent=19 // pred_check
          %p530 = pneg %p142
        $region30: #{my_model_forward.2} parent=19 // pred_check_branch
          %532 = sbr.rel (%p530) target = $region32
        $region31: #{my_model_forward.2} parent=19 // pred_region
          %s533 = sand.u32 %s49, 1
          %s534 = scalar_lea.sflag [#allocation8], %s533
          %s535 = sand.u32 %s132, 1
          %s536 = smul.addr %s535, 16
          %s537 = scalar_lea.vmem [#allocation9], %s536
          %s539 = ssub.s32 256, 256
          %540 = vsyncadd %s534, %s539
          %s541 = smul.addr %s49, 2
          %s542 = smul.addr %s541, 128
          %s543 = scalar_lea.hbm %s3, %s542
          %s544 = sshll.u32 %s537, 4
          %s545 = int_to_ptr.vmem [resolvable:$true] %s544
          %550 = dma.hbm_to_vmem [thread:$0]  %s543, 256, %s545, %s534, 128, 128, 8
        $region32: #{my_model_forward.2} parent=19 // pred_fallthru
          _
        // Predicated region
        $region33: #{my_model_forward.2} parent=19 // pred_check
          %p551 = pneg %p168
        $region34: #{my_model_forward.2} parent=19 // pred_check_branch
          %553 = sbr.rel (%p551) target = $region36
        $region35: #{my_model_forward.2} parent=19 // pred_region
          %s554 = sand.u32 %s49, 1
          %s555 = scalar_lea.sflag [#allocation11], %s554
          %s556 = sand.u32 %s158, 1
          %s557 = scalar_lea.vmem [#allocation10], %s556
          %s559 = ssub.s32 16, 16
          %560 = vsyncadd %s555, %s559
          %s561 = smul.addr %s49, 16
          %s562 = scalar_lea.hbm %s4, %s561
          %s564 = sshll.u32 %s557, 4
          %s565 = int_to_ptr.vmem [resolvable:$true] %s564
          %567 = dma.hbm_to_vmem [thread:$0]  %s562, 16, %s565, %s555
        $region36: #{my_model_forward.2} parent=19 // pred_fallthru
          _
        // Predicated region
        $region37: #{my_model_forward.2} parent=19 // pred_check
          %p568 = pneg %p194
        $region38: #{my_model_forward.2} parent=19 // pred_check_branch
          %570 = sbr.rel (%p568) target = $region40
        $region39: #{my_model_forward.2} parent=19 // pred_region
          %s571 = sand.u32 %s49, 1
          %s572 = scalar_lea.sflag [#allocation11], %s571
          %s573 = sand.u32 %s184, 1
          %s574 = scalar_lea.vmem [#allocation12], %s573
          %s576 = ssub.s32 16, 16
          %577 = vsyncadd %s572, %s576
          %s578 = smul.addr %s49, 16
          %s579 = scalar_lea.hbm %s5, %s578
          %s581 = sshll.u32 %s574, 4
          %s582 = int_to_ptr.vmem [resolvable:$true] %s581
          %584 = dma.hbm_to_vmem [thread:$0]  %s579, 16, %s582, %s572
        $region40: #{my_model_forward.2} parent=19 // pred_fallthru
          _
        // Predicated region
        $region41: #{my_model_forward.2} parent=19 // pred_check
          %p585 = pneg %p220
        $region42: #{my_model_forward.2} parent=19 // pred_check_branch
          %587 = sbr.rel (%p585) target = $region44
        $region43: #{my_model_forward.2} parent=19 // pred_region
          %s588 = sand.u32 %s49, 1
          %s589 = scalar_lea.sflag [#allocation14], %s588
          %s590 = sand.u32 %s210, 1
          %s591 = scalar_lea.vmem [#allocation13], %s590
          %s593 = ssub.s32 16, 16
          %594 = vsyncadd %s589, %s593
          %s595 = smul.addr %s49, 16
          %s596 = scalar_lea.hbm %s6, %s595
          %s598 = sshll.u32 %s591, 4
          %s599 = int_to_ptr.vmem [resolvable:$true] %s598
          %601 = dma.hbm_to_vmem [thread:$0]  %s596, 16, %s599, %s589
        $region44: #{my_model_forward.2} parent=19 // pred_fallthru
          _
        // Predicated region
        $region45: #{my_model_forward.2} parent=19 // pred_check
          %p602 = pneg %p246
        $region46: #{my_model_forward.2} parent=19 // pred_check_branch
          %604 = sbr.rel (%p602) target = $region48
        $region47: #{my_model_forward.2} parent=19 // pred_region
          %s605 = sand.u32 %s49, 1
          %s606 = scalar_lea.sflag [#allocation14], %s605
          %s607 = sand.u32 %s236, 1
          %s608 = smul.addr %s607, 32
          %s609 = scalar_lea.vmem [#allocation15], %s608
          %s611 = ssub.s32 512, 512
          %612 = vsyncadd %s606, %s611
          %s613 = smul.addr %s49, 4
          %s614 = smul.addr %s613, 128
          %s615 = scalar_lea.hbm %s7, %s614
          %s616 = sshll.u32 %s609, 4
          %s617 = int_to_ptr.vmem [resolvable:$true] %s616
          %622 = dma.hbm_to_vmem [thread:$0]  %s615, 512, %s617, %s606, 128, 128, 8
        $region48: #{my_model_forward.2} parent=19 // pred_fallthru
          _
        // Predicated region
        $region49: #{my_model_forward.2} parent=19 // pred_check
          %p623 = pneg %p272
        $region50: #{my_model_forward.2} parent=19 // pred_check_branch
          %625 = sbr.rel (%p623) target = $region52
        $region51: #{my_model_forward.2} parent=19 // pred_region
          %s626 = sand.u32 %s49, 1
          %s627 = scalar_lea.sflag [#allocation17], %s626
          %s628 = sand.u32 %s262, 1
          %s629 = scalar_lea.vmem [#allocation16], %s628
          %s631 = ssub.s32 16, 16
          %632 = vsyncadd %s627, %s631
          %s633 = smul.addr %s49, 16
          %s634 = scalar_lea.hbm %s8, %s633
          %s636 = sshll.u32 %s629, 4
          %s637 = int_to_ptr.vmem [resolvable:$true] %s636
          %639 = dma.hbm_to_vmem [thread:$0]  %s634, 16, %s637, %s627
        $region52: #{my_model_forward.2} parent=19 // pred_fallthru
          _
        // Predicated region
        $region53: #{my_model_forward.2} parent=19 // pred_check
          %p640 = pneg %p298
        $region54: #{my_model_forward.2} parent=19 // pred_check_branch
          %642 = sbr.rel (%p640) target = $region56
        $region55: #{my_model_forward.2} parent=19 // pred_region
          %s643 = sand.u32 %s49, 1
          %s644 = scalar_lea.sflag [#allocation17], %s643
          %s645 = sand.u32 %s288, 1
          %s646 = scalar_lea.vmem [#allocation18], %s645
          %s648 = ssub.s32 16, 16
          %649 = vsyncadd %s644, %s648
          %s650 = smul.addr %s49, 16
          %s651 = scalar_lea.hbm %s9, %s650
          %s653 = sshll.u32 %s646, 4
          %s654 = int_to_ptr.vmem [resolvable:$true] %s653
          %656 = dma.hbm_to_vmem [thread:$0]  %s651, 16, %s654, %s644
        $region56: #{my_model_forward.2} parent=19 // pred_fallthru
          _
        // Predicated region
        $region57: #{my_model_forward.2} parent=19 // pred_check
          %p657 = pneg %p324
        $region58: #{my_model_forward.2} parent=19 // pred_check_branch
          %659 = sbr.rel (%p657) target = $region60
        $region59: #{my_model_forward.2} parent=19 // pred_region
          %s660 = sand.u32 %s49, 1
          %s661 = scalar_lea.sflag [#allocation20], %s660
          %s662 = sand.u32 %s314, 1
          %s663 = scalar_lea.vmem [#allocation19], %s662
          %s665 = ssub.s32 16, 16
          %666 = vsyncadd %s661, %s665
          %s667 = smul.addr %s49, 16
          %s668 = scalar_lea.hbm %s10, %s667
          %s670 = sshll.u32 %s663, 4
          %s671 = int_to_ptr.vmem [resolvable:$true] %s670
          %673 = dma.hbm_to_vmem [thread:$0]  %s668, 16, %s671, %s661
        $region60: #{my_model_forward.2} parent=19 // pred_fallthru
          _
        // Predicated region
        $region61: #{my_model_forward.2} parent=19 // pred_check
          %p674 = pneg %p350
        $region62: #{my_model_forward.2} parent=19 // pred_check_branch
          %676 = sbr.rel (%p674) target = $region64
        $region63: #{my_model_forward.2} parent=19 // pred_region
          %s677 = sand.u32 %s49, 1
          %s678 = scalar_lea.sflag [#allocation20], %s677
          %s679 = sand.u32 %s340, 1
          %s680 = smul.addr %s679, 32
          %s681 = scalar_lea.vmem [#allocation21], %s680
          %s683 = ssub.s32 512, 512
          %684 = vsyncadd %s678, %s683
          %s685 = smul.addr %s49, 4
          %s686 = smul.addr %s685, 128
          %s687 = scalar_lea.hbm %s11, %s686
          %s688 = sshll.u32 %s681, 4
          %s689 = int_to_ptr.vmem [resolvable:$true] %s688
          %694 = dma.hbm_to_vmem [thread:$0]  %s687, 512, %s689, %s678, 128, 128, 8
        $region64: #{my_model_forward.2} parent=19 // pred_fallthru
          _
        // Predicated region
        $region65: #{my_model_forward.2} parent=19 // pred_check
          %p695 = pneg %p376
        $region66: #{my_model_forward.2} parent=19 // pred_check_branch
          %697 = sbr.rel (%p695) target = $region68
        $region67: #{my_model_forward.2} parent=19 // pred_region
          %s698 = sand.u32 %s49, 1
          %s699 = scalar_lea.sflag [#allocation23], %s698
          %s700 = sand.u32 %s366, 1
          %s701 = scalar_lea.vmem [#allocation22], %s700
          %s703 = ssub.s32 16, 16
          %704 = vsyncadd %s699, %s703
          %s705 = smul.addr %s49, 16
          %s706 = scalar_lea.hbm %s12, %s705
          %s708 = sshll.u32 %s701, 4
          %s709 = int_to_ptr.vmem [resolvable:$true] %s708
          %711 = dma.hbm_to_vmem [thread:$0]  %s706, 16, %s709, %s699
        $region68: #{my_model_forward.2} parent=19 // pred_fallthru
          _
        // Predicated region
        $region69: #{my_model_forward.2} parent=19 // pred_check
          %p712 = pneg %p402
        $region70: #{my_model_forward.2} parent=19 // pred_check_branch
          %714 = sbr.rel (%p712) target = $region72
        $region71: #{my_model_forward.2} parent=19 // pred_region
          %s715 = sand.u32 %s49, 1
          %s716 = scalar_lea.sflag [#allocation23], %s715
          %s717 = sand.u32 %s392, 1
          %s718 = scalar_lea.vmem [#allocation24], %s717
          %s720 = ssub.s32 16, 16
          %721 = vsyncadd %s716, %s720
          %s722 = smul.addr %s49, 16
          %s723 = scalar_lea.hbm %s13, %s722
          %s725 = sshll.u32 %s718, 4
          %s726 = int_to_ptr.vmem [resolvable:$true] %s725
          %728 = dma.hbm_to_vmem [thread:$0]  %s723, 16, %s726, %s716
        $region72: #{my_model_forward.2} parent=19 // pred_fallthru
          _
        // Predicated region
        $region73: #{my_model_forward.2} parent=19 // pred_check
          %p729 = pneg %p428
        $region74: #{my_model_forward.2} parent=19 // pred_check_branch
          %731 = sbr.rel (%p729) target = $region76
        $region75: #{my_model_forward.2} parent=19 // pred_region
          %s732 = sand.u32 %s418, 1
          %s733 = scalar_lea.sflag [#allocation26], %s732
          %s734 = sand.u32 %s418, 1
          %s735 = scalar_lea.vmem [#allocation25], %s734
          %s737 = ssub.s32 16, 16
          %738 = vsyncadd %s733, %s737
          %s739 = smul.addr %s49, 16
          %s740 = scalar_lea.hbm %s14, %s739
          %s742 = sshll.u32 %s735, 4
          %s743 = int_to_ptr.vmem [resolvable:$true] %s742
          %745 = dma.hbm_to_vmem [thread:$0]  %s740, 16, %s743, %s733
        $region76: #{my_model_forward.2} parent=19 // pred_fallthru
          _
      $region20: #{my_model_forward.2} parent=5 // pred_fallthru
        _
      %p746 = scmp.le.s32.totalorder 1, %s49
      %p747 = scmp.lt.s32.totalorder %s49, 5
      %p748 = pnand %p746, %p747
      %p749 = pneg %p748
      // Predicated region
      $region77: #{my_model_forward.2} parent=5 // pred_check
        _
      $region78: #{my_model_forward.2} parent=5 // pred_check_branch
        %751 = sbr.rel (%p748) target = $region80
      $region79: #{my_model_forward.2} parent=5 // pred_region
        %s752 = ssub.s32 %s49, 1
        // Predicated region
        $region81: #{my_model_forward.2} parent=79 // pred_check
          %p753 = pneg %p70
        $region82: #{my_model_forward.2} parent=79 // pred_check_branch
          %755 = sbr.rel (%p753) target = $region84
        $region83: #{my_model_forward.2} parent=79 // pred_region
          %756 = dma.done [#allocation5], 64
        $region84: #{my_model_forward.2} parent=79 // pred_fallthru
          _
        %s757 = sand.u32 %s83, 1
        %s758 = scalar_lea.sflag [#allocation3], %s757
        %s759 = sand.u32 %s83, 1
        %s760 = smul.addr %s759, 16
        %s761 = scalar_lea.vmem [#allocation6], %s760
        // Predicated region
        $region85: #{my_model_forward.2} parent=79 // pred_check
          %p762 = pneg %p96
        $region86: #{my_model_forward.2} parent=79 // pred_check_branch
          %764 = sbr.rel (%p762) target = $region88
        $region87: #{my_model_forward.2} parent=79 // pred_region
          %765 = dma.done %s758, 256
        $region88: #{my_model_forward.2} parent=79 // pred_fallthru
          _
        %s766 = sand.u32 %s54, 1
        %s767 = scalar_lea.sflag [#allocation8], %s766
        %s768 = sand.u32 %s109, 1
        %s769 = smul.addr %s768, 16
        %s770 = scalar_lea.vmem [#allocation7], %s769
        // Predicated region
        $region89: #{my_model_forward.2} parent=79 // pred_check
          %p771 = pneg %p122
        $region90: #{my_model_forward.2} parent=79 // pred_check_branch
          %773 = sbr.rel (%p771) target = $region92
        $region91: #{my_model_forward.2} parent=79 // pred_region
          %774 = dma.done %s767, 256
        $region92: #{my_model_forward.2} parent=79 // pred_fallthru
          _
        %s775 = sand.u32 %s54, 1
        %s776 = scalar_lea.sflag [#allocation8], %s775
        %s777 = sand.u32 %s135, 1
        %s778 = smul.addr %s777, 16
        %s779 = scalar_lea.vmem [#allocation9], %s778
        // Predicated region
        $region93: #{my_model_forward.2} parent=79 // pred_check
          %p780 = pneg %p148
        $region94: #{my_model_forward.2} parent=79 // pred_check_branch
          %782 = sbr.rel (%p780) target = $region96
        $region95: #{my_model_forward.2} parent=79 // pred_region
          %783 = dma.done %s776, 256
        $region96: #{my_model_forward.2} parent=79 // pred_fallthru
          _
        %s784 = sand.u32 %s54, 1
        %s785 = scalar_lea.sflag [#allocation11], %s784
        %s786 = sand.u32 %s161, 1
        %s787 = scalar_lea.vmem [#allocation10], %s786
        // Predicated region
        $region97: #{my_model_forward.2} parent=79 // pred_check
          %p788 = pneg %p174
        $region98: #{my_model_forward.2} parent=79 // pred_check_branch
          %790 = sbr.rel (%p788) target = $region100
        $region99: #{my_model_forward.2} parent=79 // pred_region
          %791 = dma.done %s785, 16
        $region100: #{my_model_forward.2} parent=79 // pred_fallthru
          _
        %s792 = sand.u32 %s54, 1
        %s793 = scalar_lea.sflag [#allocation11], %s792
        %s794 = sand.u32 %s187, 1
        %s795 = scalar_lea.vmem [#allocation12], %s794
        // Predicated region
        $region101: #{my_model_forward.2} parent=79 // pred_check
          %p796 = pneg %p200
        $region102: #{my_model_forward.2} parent=79 // pred_check_branch
          %798 = sbr.rel (%p796) target = $region104
        $region103: #{my_model_forward.2} parent=79 // pred_region
          %799 = dma.done %s793, 16
        $region104: #{my_model_forward.2} parent=79 // pred_fallthru
          _
        %s800 = sand.u32 %s54, 1
        %s801 = scalar_lea.sflag [#allocation14], %s800
        %s802 = sand.u32 %s213, 1
        %s803 = scalar_lea.vmem [#allocation13], %s802
        // Predicated region
        $region105: #{my_model_forward.2} parent=79 // pred_check
          %p804 = pneg %p226
        $region106: #{my_model_forward.2} parent=79 // pred_check_branch
          %806 = sbr.rel (%p804) target = $region108
        $region107: #{my_model_forward.2} parent=79 // pred_region
          %807 = dma.done %s801, 16
        $region108: #{my_model_forward.2} parent=79 // pred_fallthru
          _
        %s808 = sand.u32 %s54, 1
        %s809 = scalar_lea.sflag [#allocation14], %s808
        %s810 = sand.u32 %s239, 1
        %s811 = smul.addr %s810, 32
        %s812 = scalar_lea.vmem [#allocation15], %s811
        // Predicated region
        $region109: #{my_model_forward.2} parent=79 // pred_check
          %p813 = pneg %p252
        $region110: #{my_model_forward.2} parent=79 // pred_check_branch
          %815 = sbr.rel (%p813) target = $region112
        $region111: #{my_model_forward.2} parent=79 // pred_region
          %816 = dma.done %s809, 512
        $region112: #{my_model_forward.2} parent=79 // pred_fallthru
          _
        %s817 = sand.u32 %s54, 1
        %s818 = scalar_lea.sflag [#allocation17], %s817
        %s819 = sand.u32 %s265, 1
        %s820 = scalar_lea.vmem [#allocation16], %s819
        // Predicated region
        $region113: #{my_model_forward.2} parent=79 // pred_check
          %p821 = pneg %p278
        $region114: #{my_model_forward.2} parent=79 // pred_check_branch
          %823 = sbr.rel (%p821) target = $region116
        $region115: #{my_model_forward.2} parent=79 // pred_region
          %824 = dma.done %s818, 16
        $region116: #{my_model_forward.2} parent=79 // pred_fallthru
          _
        %s825 = sand.u32 %s54, 1
        %s826 = scalar_lea.sflag [#allocation17], %s825
        %s827 = sand.u32 %s291, 1
        %s828 = scalar_lea.vmem [#allocation18], %s827
        // Predicated region
        $region117: #{my_model_forward.2} parent=79 // pred_check
          %p829 = pneg %p304
        $region118: #{my_model_forward.2} parent=79 // pred_check_branch
          %831 = sbr.rel (%p829) target = $region120
        $region119: #{my_model_forward.2} parent=79 // pred_region
          %832 = dma.done %s826, 16
        $region120: #{my_model_forward.2} parent=79 // pred_fallthru
          _
        %s833 = sand.u32 %s54, 1
        %s834 = scalar_lea.sflag [#allocation20], %s833
        %s835 = sand.u32 %s317, 1
        %s836 = scalar_lea.vmem [#allocation19], %s835
        // Predicated region
        $region121: #{my_model_forward.2} parent=79 // pred_check
          %p837 = pneg %p330
        $region122: #{my_model_forward.2} parent=79 // pred_check_branch
          %839 = sbr.rel (%p837) target = $region124
        $region123: #{my_model_forward.2} parent=79 // pred_region
          %840 = dma.done %s834, 16
        $region124: #{my_model_forward.2} parent=79 // pred_fallthru
          _
        %s841 = sand.u32 %s54, 1
        %s842 = scalar_lea.sflag [#allocation20], %s841
        %s843 = sand.u32 %s343, 1
        %s844 = smul.addr %s843, 32
        %s845 = scalar_lea.vmem [#allocation21], %s844
        // Predicated region
        $region125: #{my_model_forward.2} parent=79 // pred_check
          %p846 = pneg %p356
        $region126: #{my_model_forward.2} parent=79 // pred_check_branch
          %848 = sbr.rel (%p846) target = $region128
        $region127: #{my_model_forward.2} parent=79 // pred_region
          %849 = dma.done %s842, 512
        $region128: #{my_model_forward.2} parent=79 // pred_fallthru
          _
        %s850 = sand.u32 %s54, 1
        %s851 = scalar_lea.sflag [#allocation23], %s850
        %s852 = sand.u32 %s369, 1
        %s853 = scalar_lea.vmem [#allocation22], %s852
        // Predicated region
        $region129: #{my_model_forward.2} parent=79 // pred_check
          %p854 = pneg %p382
        $region130: #{my_model_forward.2} parent=79 // pred_check_branch
          %856 = sbr.rel (%p854) target = $region132
        $region131: #{my_model_forward.2} parent=79 // pred_region
          %857 = dma.done %s851, 16
        $region132: #{my_model_forward.2} parent=79 // pred_fallthru
          _
        %s858 = sand.u32 %s54, 1
        %s859 = scalar_lea.sflag [#allocation23], %s858
        %s860 = sand.u32 %s395, 1
        %s861 = scalar_lea.vmem [#allocation24], %s860
        // Predicated region
        $region133: #{my_model_forward.2} parent=79 // pred_check
          %p862 = pneg %p408
        $region134: #{my_model_forward.2} parent=79 // pred_check_branch
          %864 = sbr.rel (%p862) target = $region136
        $region135: #{my_model_forward.2} parent=79 // pred_region
          %865 = dma.done %s859, 16
        $region136: #{my_model_forward.2} parent=79 // pred_fallthru
          _
        %s866 = sand.u32 %s421, 1
        %s867 = scalar_lea.sflag [#allocation26], %s866
        %s868 = sand.u32 %s421, 1
        %s869 = scalar_lea.vmem [#allocation25], %s868
        // Predicated region
        $region137: #{my_model_forward.2} parent=79 // pred_check
          %p870 = pneg %p434
        $region138: #{my_model_forward.2} parent=79 // pred_check_branch
          %872 = sbr.rel (%p870) target = $region140
        $region139: #{my_model_forward.2} parent=79 // pred_region
          %873 = dma.done %s867, 16
        $region140: #{my_model_forward.2} parent=79 // pred_fallthru
          _
        %874 = sfence
        %p875 = pneg %p70
        %p876 = pneg %p67
        %s877 = sand.u32 %s83, 1
        %s878 = scalar_lea.sflag [#allocation3], %s877
        %s879 = sand.u32 %s83, 1
        %s880 = smul.addr %s879, 16
        %s881 = scalar_lea.vmem [#allocation6], %s880
        %p882 = pneg %p96
        %p883 = pneg %p93
        %s884 = sand.u32 %s54, 1
        %s885 = scalar_lea.sflag [#allocation8], %s884
        %s886 = sand.u32 %s109, 1
        %s887 = smul.addr %s886, 16
        %s888 = scalar_lea.vmem [#allocation7], %s887
        %p889 = pneg %p122
        %p890 = pneg %p119
        %s891 = sand.u32 %s54, 1
        %s892 = scalar_lea.sflag [#allocation8], %s891
        %s893 = sand.u32 %s135, 1
        %s894 = smul.addr %s893, 16
        %s895 = scalar_lea.vmem [#allocation9], %s894
        %p896 = pneg %p148
        %p897 = pneg %p145
        %s898 = sand.u32 %s54, 1
        %s899 = scalar_lea.sflag [#allocation11], %s898
        %s900 = sand.u32 %s161, 1
        %s901 = scalar_lea.vmem [#allocation10], %s900
        %p902 = pneg %p174
        %p903 = pneg %p171
        %s904 = sand.u32 %s54, 1
        %s905 = scalar_lea.sflag [#allocation11], %s904
        %s906 = sand.u32 %s187, 1
        %s907 = scalar_lea.vmem [#allocation12], %s906
        %p908 = pneg %p200
        %p909 = pneg %p197
        %s910 = sand.u32 %s54, 1
        %s911 = scalar_lea.sflag [#allocation14], %s910
        %s912 = sand.u32 %s213, 1
        %s913 = scalar_lea.vmem [#allocation13], %s912
        %p914 = pneg %p226
        %p915 = pneg %p223
        %s916 = sand.u32 %s54, 1
        %s917 = scalar_lea.sflag [#allocation14], %s916
        %s918 = sand.u32 %s239, 1
        %s919 = smul.addr %s918, 32
        %s920 = scalar_lea.vmem [#allocation15], %s919
        %p921 = pneg %p252
        %p922 = pneg %p249
        %s923 = sand.u32 %s54, 1
        %s924 = scalar_lea.sflag [#allocation17], %s923
        %s925 = sand.u32 %s265, 1
        %s926 = scalar_lea.vmem [#allocation16], %s925
        %p927 = pneg %p278
        %p928 = pneg %p275
        %s929 = sand.u32 %s54, 1
        %s930 = scalar_lea.sflag [#allocation17], %s929
        %s931 = sand.u32 %s291, 1
        %s932 = scalar_lea.vmem [#allocation18], %s931
        %p933 = pneg %p304
        %p934 = pneg %p301
        %s935 = sand.u32 %s54, 1
        %s936 = scalar_lea.sflag [#allocation20], %s935
        %s937 = sand.u32 %s317, 1
        %s938 = scalar_lea.vmem [#allocation19], %s937
        %p939 = pneg %p330
        %p940 = pneg %p327
        %s941 = sand.u32 %s54, 1
        %s942 = scalar_lea.sflag [#allocation20], %s941
        %s943 = sand.u32 %s343, 1
        %s944 = smul.addr %s943, 32
        %s945 = scalar_lea.vmem [#allocation21], %s944
        %p946 = pneg %p356
        %p947 = pneg %p353
        %s948 = sand.u32 %s54, 1
        %s949 = scalar_lea.sflag [#allocation23], %s948
        %s950 = sand.u32 %s369, 1
        %s951 = scalar_lea.vmem [#allocation22], %s950
        %p952 = pneg %p382
        %p953 = pneg %p379
        %s954 = sand.u32 %s54, 1
        %s955 = scalar_lea.sflag [#allocation23], %s954
        %s956 = sand.u32 %s395, 1
        %s957 = scalar_lea.vmem [#allocation24], %s956
        %p958 = pneg %p408
        %p959 = pneg %p405
        %s960 = sand.u32 %s421, 1
        %s961 = scalar_lea.sflag [#allocation26], %s960
        %s962 = sand.u32 %s421, 1
        %s963 = scalar_lea.vmem [#allocation25], %s962
        %p964 = pneg %p434
        %p965 = pneg %p431
        %p966 = pneg %p460
        %p967 = pneg %p457
        %s968 = sand.u32 %s447, 1
        %s969 = scalar_lea.sflag [#allocation4], %s968
        %s970 = sand.u32 %s447, 1
        %s971 = smul.addr %s970, 16
        %s972 = scalar_lea.vmem [#allocation27], %s971
        %v973 = vld [vmem:[%s761] sm:$0xff]
        %v974 = vld [vmem:[%s761 + $0x8] sm:$0xff]
        %v975 = vld [vmem:[%s770] sm:$0xff]
        %v976 = vld [vmem:[%s770 + $0x8] sm:$0xff]
        %v977 = vld [vmem:[%s779] sm:$0xff]
        %v978 = vld [vmem:[%s779 + $0x8] sm:$0xff]
        %v979 = vld [vmem:[%s787] sm:$0x1]
        %v981 = vlaneseq
        %v982 = vshrl.u32 %v981, 7
        %v983 = vsub.s32 0, %v982
        %v984 = vrot.slane %v979, %v983
        %vm986 = vcmask 130048
        %v988 = vsel %vm986, %v975, 0
        %v991 = vsel %vm986, %v976, 0
        %993 = vmatprep.subr.mxu0 0.0
        %994 = vmatpush1.msra.mxu0 %v977
        %995 = vmatprep.subr.mxu0 0.0
        %996 = vmatpush1.msra.mxu0 %v978
        %997 = vmatprep.subr.mxu0 0.0
        %998 = vmatpush1.msra.mxu0 0.0
        %999 = vmatprep.subr.mxu0 0.0
        %1000 = vmatpush1.msra.mxu0 0.0
        %1001 = vmatprep.subr.mxu0 0.0
        %1002 = vmatpush1.msra.mxu0 0.0
        %1003 = vmatprep.subr.mxu0 0.0
        %1004 = vmatpush1.msra.mxu0 0.0
        %1005 = vmatprep.subr.mxu0 0.0
        %1006 = vmatpush1.msra.mxu0 0.0
        %1007 = vmatprep.subr.mxu0 0.0
        %1008 = vmatpush1.msra.mxu0 0.0
        %1009 = vmatprep.subr.mxu0 0.0
        %1010 = vmatpush1.msra.mxu0 0.0
        %1011 = vmatprep.subr.mxu0 0.0
        %1012 = vmatpush1.msra.mxu0 0.0
        %1013 = vmatprep.subr.mxu0 0.0
        %1014 = vmatpush1.msra.mxu0 0.0
        %1015 = vmatprep.subr.mxu0 0.0
        %1016 = vmatpush1.msra.mxu0 0.0
        %1017 = vmatprep.subr.mxu0 0.0
        %1018 = vmatpush1.msra.mxu0 0.0
        %1019 = vmatprep.subr.mxu0 0.0
        %1020 = vmatpush1.msra.mxu0 0.0
        %1021 = vmatprep.subr.mxu0 0.0
        %1022 = vmatpush1.msra.mxu0 0.0
        %1023 = vmatprep.subr.mxu0 0.0
        %1024 = vmatpush1.msra.mxu0 0.0
        %1025 = vmatprep.subr.mxu0 0.0
        %1026 = vmatpush1.msra.mxu0 0.0
        %1027 = vmatprep.subr.mxu0 0.0
        %1028 = vmatpush1.msra.mxu0 0.0
        %1029 = vmatprep.subr.mxu0 0.0
        %1030 = vmatpush1.msra.mxu0 0.0
        %1031 = vmatprep.subr.mxu0 0.0
        %1032 = vmatpush1.msra.mxu0 0.0
        %1033 = vmatprep.subr.mxu0 0.0
        %1034 = vmatpush1.msra.mxu0 0.0
        %1035 = vmatprep.subr.mxu0 0.0
        %1036 = vmatpush1.msra.mxu0 0.0
        %1037 = vmatprep.subr.mxu0 0.0
        %1038 = vmatpush1.msra.mxu0 0.0
        %1039 = vmatprep.subr.mxu0 0.0
        %1040 = vmatpush1.msra.mxu0 0.0
        %1041 = vmatprep.subr.mxu0 0.0
        %1042 = vmatpush1.msra.mxu0 0.0
        %1043 = vmatprep.subr.mxu0 0.0
        %1044 = vmatpush1.msra.mxu0 0.0
        %1045 = vmatprep.subr.mxu0 0.0
        %1046 = vmatpush1.msra.mxu0 0.0
        %1047 = vmatprep.subr.mxu0 0.0
        %1048 = vmatpush1.msra.mxu0 0.0
        %1049 = vmatprep.subr.mxu0 0.0
        %1050 = vmatpush1.msra.mxu0 0.0
        %1051 = vmatprep.subr.mxu0 0.0
        %1052 = vmatpush1.msra.mxu0 0.0
        %1053 = vmatprep.subr.mxu0 0.0
        %1054 = vmatpush1.msra.mxu0 0.0
        %1055 = vmatprep.subr.mxu0 0.0
        %1056 = vmatpush1.msra.mxu0 0.0
        %1057 = vmatprep.mubr.f32.mxu0 0.0
        %1058 = vmatmul.mubr.f32.gmra.mrb[0].mxu0 %v988
        %v1059 = vpop.f32.mrb[0].mxu0
        %v1060 = vadd.f32 %v984, %v1059
        %v1061 = vpop.f32.mrb[0].mxu0
        %1062 = vmatprep.mubr.f32.mxu0 0.0
        %1063 = vmatmul.mubr.f32.gmra.mrb[0].mxu0 %v991
        %v1064 = vpop.f32.mrb[0].mxu0
        %v1065 = vadd.f32 %v984, %v1064
        %v1066 = vpop.f32.mrb[0].mxu0
        %1067 = vdwg.mxu0
        %v1068 = vld [vmem:[%s795] sm:$0x1]
        %v1069 = vld [vmem:[%s803] sm:$0x1]
        %vm1070 = vcmask 261120
        %v1071 = vsel %vm1070, %v1060, 0.0
        %1072 = vadd.xlane.f32.xlu0 %v1071
        %v1073 = vpop.xlane.xlu0 %1072
        %v1074 = vsel %vm1070, %v1065, 0.0
        %1075 = vadd.xlane.f32.xlu0 %v1074
        %v1076 = vpop.xlane.xlu0 %1075
        %v1077 = vrcp.pop 32.0
        %v1078 = vmul.f32 %v1073, %v1077
        %v1079 = vmul.f32 %v1076, %v1077
        %v1080 = vsub.f32 %v1060, %v1078
        %v1081 = vsub.f32 %v1065, %v1079
        %v1082 = vmul.f32 %v1080, %v1080
        %v1083 = vmul.f32 %v1081, %v1081
        %v1084 = vsel %vm1070, %v1082, 0.0
        %1085 = vadd.xlane.f32.xlu0 %v1084
        %v1086 = vpop.xlane.xlu0 %1085
        %v1087 = vsel %vm1070, %v1083, 0.0
        %1088 = vadd.xlane.f32.xlu0 %v1087
        %v1089 = vpop.xlane.xlu0 %1088
        %v1090 = vmul.f32 %v1086, %v1077
        %v1091 = vmul.f32 %v1089, %v1077
        %v1092 = vadd.f32 %v1090, 1e-05
        %v1093 = vadd.f32 %v1091, 1e-05
        %v1094 = vrsqrt.pop %v1092
        %v1095 = vrsqrt.pop %v1093
        %v1096 = vmul.f32 %v1080, %v1094
        %v1097 = vmul.f32 %v1081, %v1095
        %v1099 = vlaneseq
        %v1100 = vshrl.u32 %v1099, 7
        %v1101 = vsub.s32 0, %v1100
        %v1102 = vrot.slane %v1068, %v1101
        %v1104 = vmul.f32 %v1096, %v1102
        %v1105 = vmul.f32 %v1097, %v1102
        %v1107 = vlaneseq
        %v1108 = vshrl.u32 %v1107, 7
        %v1109 = vsub.s32 0, %v1108
        %v1110 = vrot.slane %v1069, %v1109
        %v1112 = vadd.f32 %v1104, %v1110
        %v1113 = vadd.f32 %v1105, %v1110
        %v1114 = vmax.f32 %v1112, 0.0
        %v1115 = vmax.f32 %v1113, 0.0
        %v1117 = vsel %vm986, %v973, 0
        %v1120 = vsel %vm986, %v974, 0
        %1122 = vmatprep.subr.mxu0 0.0
        %1123 = vmatpush1.msra.mxu0 %v1114
        %1124 = vmatprep.subr.mxu0 0.0
        %1125 = vmatpush1.msra.mxu0 %v1115
        %1126 = vmatprep.subr.mxu0 0.0
        %1127 = vmatpush1.msra.mxu0 0.0
        %1128 = vmatprep.subr.mxu0 0.0
        %1129 = vmatpush1.msra.mxu0 0.0
        %1130 = vmatprep.subr.mxu0 0.0
        %1131 = vmatpush1.msra.mxu0 0.0
        %1132 = vmatprep.subr.mxu0 0.0
        %1133 = vmatpush1.msra.mxu0 0.0
        %1134 = vmatprep.subr.mxu0 0.0
        %1135 = vmatpush1.msra.mxu0 0.0
        %1136 = vmatprep.subr.mxu0 0.0
        %1137 = vmatpush1.msra.mxu0 0.0
        %1138 = vmatprep.subr.mxu0 0.0
        %1139 = vmatpush1.msra.mxu0 0.0
        %1140 = vmatprep.subr.mxu0 0.0
        %1141 = vmatpush1.msra.mxu0 0.0
        %1142 = vmatprep.subr.mxu0 0.0
        %1143 = vmatpush1.msra.mxu0 0.0
        %1144 = vmatprep.subr.mxu0 0.0
        %1145 = vmatpush1.msra.mxu0 0.0
        %1146 = vmatprep.subr.mxu0 0.0
        %1147 = vmatpush1.msra.mxu0 0.0
        %1148 = vmatprep.subr.mxu0 0.0
        %1149 = vmatpush1.msra.mxu0 0.0
        %1150 = vmatprep.subr.mxu0 0.0
        %1151 = vmatpush1.msra.mxu0 0.0
        %1152 = vmatprep.subr.mxu0 0.0
        %1153 = vmatpush1.msra.mxu0 0.0
        %1154 = vmatprep.subr.mxu0 0.0
        %1155 = vmatpush1.msra.mxu0 0.0
        %1156 = vmatprep.subr.mxu0 0.0
        %1157 = vmatpush1.msra.mxu0 0.0
        %1158 = vmatprep.subr.mxu0 0.0
        %1159 = vmatpush1.msra.mxu0 0.0
        %1160 = vmatprep.subr.mxu0 0.0
        %1161 = vmatpush1.msra.mxu0 0.0
        %1162 = vmatprep.subr.mxu0 0.0
        %1163 = vmatpush1.msra.mxu0 0.0
        %1164 = vmatprep.subr.mxu0 0.0
        %1165 = vmatpush1.msra.mxu0 0.0
        %1166 = vmatprep.subr.mxu0 0.0
        %1167 = vmatpush1.msra.mxu0 0.0
        %1168 = vmatprep.subr.mxu0 0.0
        %1169 = vmatpush1.msra.mxu0 0.0
        %1170 = vmatprep.subr.mxu0 0.0
        %1171 = vmatpush1.msra.mxu0 0.0
        %1172 = vmatprep.subr.mxu0 0.0
        %1173 = vmatpush1.msra.mxu0 0.0
        %1174 = vmatprep.subr.mxu0 0.0
        %1175 = vmatpush1.msra.mxu0 0.0
        %1176 = vmatprep.subr.mxu0 0.0
        %1177 = vmatpush1.msra.mxu0 0.0
        %1178 = vmatprep.subr.mxu0 0.0
        %1179 = vmatpush1.msra.mxu0 0.0
        %1180 = vmatprep.subr.mxu0 0.0
        %1181 = vmatpush1.msra.mxu0 0.0
        %1182 = vmatprep.subr.mxu0 0.0
        %1183 = vmatpush1.msra.mxu0 0.0
        %1184 = vmatprep.subr.mxu0 0.0
        %1185 = vmatpush1.msra.mxu0 0.0
        %1186 = vmatprep.mubr.f32.mxu0 0.0
        %1187 = vmatmul.mubr.f32.gmra.mrb[0].mxu0 %v1117
        %v1188 = vpop.f32.mrb[0].mxu0
        %v1189 = vadd.f32 0.0, %v1188
        %v1190 = vpop.f32.mrb[0].mxu0
        %1191 = vmatprep.mubr.f32.mxu0 0.0
        %1192 = vmatmul.mubr.f32.gmra.mrb[0].mxu0 %v1120
        %v1193 = vpop.f32.mrb[0].mxu0
        %v1194 = vadd.f32 0.0, %v1193
        %v1195 = vpop.f32.mrb[0].mxu0
        %1196 = vdwg.mxu0
        %v1197 = vld [vmem:[%s812] sm:$0xff]
        %v1198 = vld [vmem:[%s812 + $0x8] sm:$0xff]
        %v1199 = vld [vmem:[%s812 + $0x10] sm:$0xff]
        %v1200 = vld [vmem:[%s812 + $0x18] sm:$0xff]
        %v1201 = vld [vmem:[%s820] sm:$0x1]
        %v1203 = vlaneseq
        %v1204 = vshrl.u32 %v1203, 7
        %v1205 = vsub.s32 0, %v1204
        %v1206 = vrot.slane %v1201, %v1205
        %v1209 = vsel %vm1070, %v1189, 0
        %v1212 = vsel %vm1070, %v1194, 0
        %1214 = vmatprep.subr.mxu0 0.0
        %1215 = vmatpush1.msra.mxu0 %v1197
        %1216 = vmatprep.subr.mxu0 0.0
        %1217 = vmatpush1.msra.mxu0 %v1198
        %1218 = vmatprep.subr.mxu0 0.0
        %1219 = vmatpush1.msra.mxu0 %v1199
        %1220 = vmatprep.subr.mxu0 0.0
        %1221 = vmatpush1.msra.mxu0 %v1200
        %1222 = vmatprep.subr.mxu0 0.0
        %1223 = vmatpush1.msra.mxu0 0.0
        %1224 = vmatprep.subr.mxu0 0.0
        %1225 = vmatpush1.msra.mxu0 0.0
        %1226 = vmatprep.subr.mxu0 0.0
        %1227 = vmatpush1.msra.mxu0 0.0
        %1228 = vmatprep.subr.mxu0 0.0
        %1229 = vmatpush1.msra.mxu0 0.0
        %1230 = vmatprep.subr.mxu0 0.0
        %1231 = vmatpush1.msra.mxu0 0.0
        %1232 = vmatprep.subr.mxu0 0.0
        %1233 = vmatpush1.msra.mxu0 0.0
        %1234 = vmatprep.subr.mxu0 0.0
        %1235 = vmatpush1.msra.mxu0 0.0
        %1236 = vmatprep.subr.mxu0 0.0
        %1237 = vmatpush1.msra.mxu0 0.0
        %1238 = vmatprep.subr.mxu0 0.0
        %1239 = vmatpush1.msra.mxu0 0.0
        %1240 = vmatprep.subr.mxu0 0.0
        %1241 = vmatpush1.msra.mxu0 0.0
        %1242 = vmatprep.subr.mxu0 0.0
        %1243 = vmatpush1.msra.mxu0 0.0
        %1244 = vmatprep.subr.mxu0 0.0
        %1245 = vmatpush1.msra.mxu0 0.0
        %1246 = vmatprep.subr.mxu0 0.0
        %1247 = vmatpush1.msra.mxu0 0.0
        %1248 = vmatprep.subr.mxu0 0.0
        %1249 = vmatpush1.msra.mxu0 0.0
        %1250 = vmatprep.subr.mxu0 0.0
        %1251 = vmatpush1.msra.mxu0 0.0
        %1252 = vmatprep.subr.mxu0 0.0
        %1253 = vmatpush1.msra.mxu0 0.0
        %1254 = vmatprep.subr.mxu0 0.0
        %1255 = vmatpush1.msra.mxu0 0.0
        %1256 = vmatprep.subr.mxu0 0.0
        %1257 = vmatpush1.msra.mxu0 0.0
        %1258 = vmatprep.subr.mxu0 0.0
        %1259 = vmatpush1.msra.mxu0 0.0
        %1260 = vmatprep.subr.mxu0 0.0
        %1261 = vmatpush1.msra.mxu0 0.0
        %1262 = vmatprep.subr.mxu0 0.0
        %1263 = vmatpush1.msra.mxu0 0.0
        %1264 = vmatprep.subr.mxu0 0.0
        %1265 = vmatpush1.msra.mxu0 0.0
        %1266 = vmatprep.subr.mxu0 0.0
        %1267 = vmatpush1.msra.mxu0 0.0
        %1268 = vmatprep.subr.mxu0 0.0
        %1269 = vmatpush1.msra.mxu0 0.0
        %1270 = vmatprep.subr.mxu0 0.0
        %1271 = vmatpush1.msra.mxu0 0.0
        %1272 = vmatprep.subr.mxu0 0.0
        %1273 = vmatpush1.msra.mxu0 0.0
        %1274 = vmatprep.subr.mxu0 0.0
        %1275 = vmatpush1.msra.mxu0 0.0
        %1276 = vmatprep.subr.mxu0 0.0
        %1277 = vmatpush1.msra.mxu0 0.0
        %1278 = vmatprep.mubr.f32.mxu0 0.0
        %1279 = vmatmul.mubr.f32.gmra.mrb[0].mxu0 %v1209
        %v1280 = vpop.f32.mrb[0].mxu0
        %v1281 = vadd.f32 %v1206, %v1280
        %v1282 = vpop.f32.mrb[0].mxu0
        %1283 = vmatprep.mubr.f32.mxu0 0.0
        %1284 = vmatmul.mubr.f32.gmra.mrb[0].mxu0 %v1212
        %v1285 = vpop.f32.mrb[0].mxu0
        %v1286 = vadd.f32 %v1206, %v1285
        %v1287 = vpop.f32.mrb[0].mxu0
        %1288 = vdwg.mxu0
        %v1289 = vld [vmem:[%s828] sm:$0x1]
        %v1290 = vld [vmem:[%s836] sm:$0x1]
        %v1291 = vsel %vm1070, %v1281, 0.0
        %1292 = vadd.xlane.f32.xlu0 %v1291
        %v1293 = vpop.xlane.xlu0 %1292
        %v1294 = vsel %vm1070, %v1286, 0.0
        %1295 = vadd.xlane.f32.xlu0 %v1294
        %v1296 = vpop.xlane.xlu0 %1295
        %v1297 = vmul.f32 %v1293, %v1077
        %v1298 = vmul.f32 %v1296, %v1077
        %v1299 = vsub.f32 %v1281, %v1297
        %v1300 = vsub.f32 %v1286, %v1298
        %v1301 = vmul.f32 %v1299, %v1299
        %v1302 = vmul.f32 %v1300, %v1300
        %v1303 = vsel %vm1070, %v1301, 0.0
        %1304 = vadd.xlane.f32.xlu0 %v1303
        %v1305 = vpop.xlane.xlu0 %1304
        %v1306 = vsel %vm1070, %v1302, 0.0
        %1307 = vadd.xlane.f32.xlu0 %v1306
        %v1308 = vpop.xlane.xlu0 %1307
        %v1309 = vmul.f32 %v1305, %v1077
        %v1310 = vmul.f32 %v1308, %v1077
        %v1311 = vadd.f32 %v1309, 1e-05
        %v1312 = vadd.f32 %v1310, 1e-05
        %v1313 = vrsqrt.pop %v1311
        %v1314 = vrsqrt.pop %v1312
        %v1315 = vmul.f32 %v1299, %v1313
        %v1316 = vmul.f32 %v1300, %v1314
        %v1318 = vlaneseq
        %v1319 = vshrl.u32 %v1318, 7
        %v1320 = vsub.s32 0, %v1319
        %v1321 = vrot.slane %v1289, %v1320
        %v1323 = vmul.f32 %v1315, %v1321
        %v1324 = vmul.f32 %v1316, %v1321
        %v1326 = vlaneseq
        %v1327 = vshrl.u32 %v1326, 7
        %v1328 = vsub.s32 0, %v1327
        %v1329 = vrot.slane %v1290, %v1328
        %v1331 = vadd.f32 %v1323, %v1329
        %v1332 = vadd.f32 %v1324, %v1329
        %v1333 = vmax.f32 %v1331, 0.0
        %v1334 = vmax.f32 %v1332, 0.0
        %1335 = vmatprep.subr.mxu0 0.0
        %1336 = vmatpush1.msra.mxu0 %v1333
        %1337 = vmatprep.subr.mxu0 0.0
        %1338 = vmatpush1.msra.mxu0 %v1334
        %1339 = vmatprep.subr.mxu0 0.0
        %1340 = vmatpush1.msra.mxu0 0.0
        %1341 = vmatprep.subr.mxu0 0.0
        %1342 = vmatpush1.msra.mxu0 0.0
        %1343 = vmatprep.subr.mxu0 0.0
        %1344 = vmatpush1.msra.mxu0 0.0
        %1345 = vmatprep.subr.mxu0 0.0
        %1346 = vmatpush1.msra.mxu0 0.0
        %1347 = vmatprep.subr.mxu0 0.0
        %1348 = vmatpush1.msra.mxu0 0.0
        %1349 = vmatprep.subr.mxu0 0.0
        %1350 = vmatpush1.msra.mxu0 0.0
        %1351 = vmatprep.subr.mxu0 0.0
        %1352 = vmatpush1.msra.mxu0 0.0
        %1353 = vmatprep.subr.mxu0 0.0
        %1354 = vmatpush1.msra.mxu0 0.0
        %1355 = vmatprep.subr.mxu0 0.0
        %1356 = vmatpush1.msra.mxu0 0.0
        %1357 = vmatprep.subr.mxu0 0.0
        %1358 = vmatpush1.msra.mxu0 0.0
        %1359 = vmatprep.subr.mxu0 0.0
        %1360 = vmatpush1.msra.mxu0 0.0
        %1361 = vmatprep.subr.mxu0 0.0
        %1362 = vmatpush1.msra.mxu0 0.0
        %1363 = vmatprep.subr.mxu0 0.0
        %1364 = vmatpush1.msra.mxu0 0.0
        %1365 = vmatprep.subr.mxu0 0.0
        %1366 = vmatpush1.msra.mxu0 0.0
        %1367 = vmatprep.subr.mxu0 0.0
        %1368 = vmatpush1.msra.mxu0 0.0
        %1369 = vmatprep.subr.mxu0 0.0
        %1370 = vmatpush1.msra.mxu0 0.0
        %1371 = vmatprep.subr.mxu0 0.0
        %1372 = vmatpush1.msra.mxu0 0.0
        %1373 = vmatprep.subr.mxu0 0.0
        %1374 = vmatpush1.msra.mxu0 0.0
        %1375 = vmatprep.subr.mxu0 0.0
        %1376 = vmatpush1.msra.mxu0 0.0
        %1377 = vmatprep.subr.mxu0 0.0
        %1378 = vmatpush1.msra.mxu0 0.0
        %1379 = vmatprep.subr.mxu0 0.0
        %1380 = vmatpush1.msra.mxu0 0.0
        %1381 = vmatprep.subr.mxu0 0.0
        %1382 = vmatpush1.msra.mxu0 0.0
        %1383 = vmatprep.subr.mxu0 0.0
        %1384 = vmatpush1.msra.mxu0 0.0
        %1385 = vmatprep.subr.mxu0 0.0
        %1386 = vmatpush1.msra.mxu0 0.0
        %1387 = vmatprep.subr.mxu0 0.0
        %1388 = vmatpush1.msra.mxu0 0.0
        %1389 = vmatprep.subr.mxu0 0.0
        %1390 = vmatpush1.msra.mxu0 0.0
        %1391 = vmatprep.subr.mxu0 0.0
        %1392 = vmatpush1.msra.mxu0 0.0
        %1393 = vmatprep.subr.mxu0 0.0
        %1394 = vmatpush1.msra.mxu0 0.0
        %1395 = vmatprep.subr.mxu0 0.0
        %1396 = vmatpush1.msra.mxu0 0.0
        %1397 = vmatprep.subr.mxu0 0.0
        %1398 = vmatpush1.msra.mxu0 0.0
        %1399 = vmatprep.mubr.f32.mxu0 0.0
        %1400 = vmatmul.mubr.f32.gmra.mrb[0].mxu0 %v1117
        %v1401 = vpop.f32.mrb[0].mxu0
        %v1402 = vadd.f32 0.0, %v1401
        %v1403 = vpop.f32.mrb[0].mxu0
        %1404 = vmatprep.mubr.f32.mxu0 0.0
        %1405 = vmatmul.mubr.f32.gmra.mrb[0].mxu0 %v1120
        %v1406 = vpop.f32.mrb[0].mxu0
        %v1407 = vadd.f32 0.0, %v1406
        %v1408 = vpop.f32.mrb[0].mxu0
        %1409 = vdwg.mxu0
        %v1410 = vld [vmem:[%s845] sm:$0xff]
        %v1411 = vld [vmem:[%s845 + $0x8] sm:$0xff]
        %v1412 = vld [vmem:[%s845 + $0x10] sm:$0xff]
        %v1413 = vld [vmem:[%s845 + $0x18] sm:$0xff]
        %v1414 = vld [vmem:[%s853] sm:$0x1]
        %v1416 = vlaneseq
        %v1417 = vshrl.u32 %v1416, 7
        %v1418 = vsub.s32 0, %v1417
        %v1419 = vrot.slane %v1414, %v1418
        %v1422 = vsel %vm1070, %v1402, 0
        %v1425 = vsel %vm1070, %v1407, 0
        %1427 = vmatprep.subr.mxu0 0.0
        %1428 = vmatpush1.msra.mxu0 %v1410
        %1429 = vmatprep.subr.mxu0 0.0
        %1430 = vmatpush1.msra.mxu0 %v1411
        %1431 = vmatprep.subr.mxu0 0.0
        %1432 = vmatpush1.msra.mxu0 %v1412
        %1433 = vmatprep.subr.mxu0 0.0
        %1434 = vmatpush1.msra.mxu0 %v1413
        %1435 = vmatprep.subr.mxu0 0.0
        %1436 = vmatpush1.msra.mxu0 0.0
        %1437 = vmatprep.subr.mxu0 0.0
        %1438 = vmatpush1.msra.mxu0 0.0
        %1439 = vmatprep.subr.mxu0 0.0
        %1440 = vmatpush1.msra.mxu0 0.0
        %1441 = vmatprep.subr.mxu0 0.0
        %1442 = vmatpush1.msra.mxu0 0.0
        %1443 = vmatprep.subr.mxu0 0.0
        %1444 = vmatpush1.msra.mxu0 0.0
        %1445 = vmatprep.subr.mxu0 0.0
        %1446 = vmatpush1.msra.mxu0 0.0
        %1447 = vmatprep.subr.mxu0 0.0
        %1448 = vmatpush1.msra.mxu0 0.0
        %1449 = vmatprep.subr.mxu0 0.0
        %1450 = vmatpush1.msra.mxu0 0.0
        %1451 = vmatprep.subr.mxu0 0.0
        %1452 = vmatpush1.msra.mxu0 0.0
        %1453 = vmatprep.subr.mxu0 0.0
        %1454 = vmatpush1.msra.mxu0 0.0
        %1455 = vmatprep.subr.mxu0 0.0
        %1456 = vmatpush1.msra.mxu0 0.0
        %1457 = vmatprep.subr.mxu0 0.0
        %1458 = vmatpush1.msra.mxu0 0.0
        %1459 = vmatprep.subr.mxu0 0.0
        %1460 = vmatpush1.msra.mxu0 0.0
        %1461 = vmatprep.subr.mxu0 0.0
        %1462 = vmatpush1.msra.mxu0 0.0
        %1463 = vmatprep.subr.mxu0 0.0
        %1464 = vmatpush1.msra.mxu0 0.0
        %1465 = vmatprep.subr.mxu0 0.0
        %1466 = vmatpush1.msra.mxu0 0.0
        %1467 = vmatprep.subr.mxu0 0.0
        %1468 = vmatpush1.msra.mxu0 0.0
        %1469 = vmatprep.subr.mxu0 0.0
        %1470 = vmatpush1.msra.mxu0 0.0
        %1471 = vmatprep.subr.mxu0 0.0
        %1472 = vmatpush1.msra.mxu0 0.0
        %1473 = vmatprep.subr.mxu0 0.0
        %1474 = vmatpush1.msra.mxu0 0.0
        %1475 = vmatprep.subr.mxu0 0.0
        %1476 = vmatpush1.msra.mxu0 0.0
        %1477 = vmatprep.subr.mxu0 0.0
        %1478 = vmatpush1.msra.mxu0 0.0
        %1479 = vmatprep.subr.mxu0 0.0
        %1480 = vmatpush1.msra.mxu0 0.0
        %1481 = vmatprep.subr.mxu0 0.0
        %1482 = vmatpush1.msra.mxu0 0.0
        %1483 = vmatprep.subr.mxu0 0.0
        %1484 = vmatpush1.msra.mxu0 0.0
        %1485 = vmatprep.subr.mxu0 0.0
        %1486 = vmatpush1.msra.mxu0 0.0
        %1487 = vmatprep.subr.mxu0 0.0
        %1488 = vmatpush1.msra.mxu0 0.0
        %1489 = vmatprep.subr.mxu0 0.0
        %1490 = vmatpush1.msra.mxu0 0.0
        %1491 = vmatprep.mubr.f32.mxu0 0.0
        %1492 = vmatmul.mubr.f32.gmra.mrb[0].mxu0 %v1422
        %v1493 = vpop.f32.mrb[0].mxu0
        %v1494 = vadd.f32 %v1419, %v1493
        %v1495 = vpop.f32.mrb[0].mxu0
        %1496 = vmatprep.mubr.f32.mxu0 0.0
        %1497 = vmatmul.mubr.f32.gmra.mrb[0].mxu0 %v1425
        %v1498 = vpop.f32.mrb[0].mxu0
        %v1499 = vadd.f32 %v1419, %v1498
        %v1500 = vpop.f32.mrb[0].mxu0
        %1501 = vdwg.mxu0
        %v1502 = vld [vmem:[%s861] sm:$0x1]
        %v1503 = vld [vmem:[%s869] sm:$0x1]
        %v1504 = vsel %vm1070, %v1494, 0.0
        %1505 = vadd.xlane.f32.xlu0 %v1504
        %v1506 = vpop.xlane.xlu0 %1505
        %v1507 = vsel %vm1070, %v1499, 0.0
        %1508 = vadd.xlane.f32.xlu0 %v1507
        %v1509 = vpop.xlane.xlu0 %1508
        %v1510 = vmul.f32 %v1506, %v1077
        %v1511 = vmul.f32 %v1509, %v1077
        %v1512 = vsub.f32 %v1494, %v1510
        %v1513 = vsub.f32 %v1499, %v1511
        %v1514 = vmul.f32 %v1512, %v1512
        %v1515 = vmul.f32 %v1513, %v1513
        %v1516 = vsel %vm1070, %v1514, 0.0
        %1517 = vadd.xlane.f32.xlu0 %v1516
        %v1518 = vpop.xlane.xlu0 %1517
        %v1519 = vsel %vm1070, %v1515, 0.0
        %1520 = vadd.xlane.f32.xlu0 %v1519
        %v1521 = vpop.xlane.xlu0 %1520
        %v1522 = vmul.f32 %v1518, %v1077
        %v1523 = vmul.f32 %v1521, %v1077
        %v1524 = vadd.f32 %v1522, 1e-05
        %v1525 = vadd.f32 %v1523, 1e-05
        %v1526 = vrsqrt.pop %v1524
        %v1527 = vrsqrt.pop %v1525
        %v1528 = vmul.f32 %v1512, %v1526
        %v1529 = vmul.f32 %v1513, %v1527
        %v1531 = vlaneseq
        %v1532 = vshrl.u32 %v1531, 7
        %v1533 = vsub.s32 0, %v1532
        %v1534 = vrot.slane %v1502, %v1533
        %v1536 = vmul.f32 %v1528, %v1534
        %v1537 = vmul.f32 %v1529, %v1534
        %v1539 = vlaneseq
        %v1540 = vshrl.u32 %v1539, 7
        %v1541 = vsub.s32 0, %v1540
        %v1542 = vrot.slane %v1503, %v1541
        %v1544 = vadd.f32 %v1536, %v1542
        %v1545 = vadd.f32 %v1537, %v1542
        %v1546 = vmax.f32 %v1544, 0.0
        %v1547 = vmax.f32 %v1545, 0.0
        %1548 = vmatprep.subr.mxu0 0.0
        %1549 = vmatpush1.msra.mxu0 %v1546
        %1550 = vmatprep.subr.mxu0 0.0
        %1551 = vmatpush1.msra.mxu0 %v1547
        %1552 = vmatprep.subr.mxu0 0.0
        %1553 = vmatpush1.msra.mxu0 0.0
        %1554 = vmatprep.subr.mxu0 0.0
        %1555 = vmatpush1.msra.mxu0 0.0
        %1556 = vmatprep.subr.mxu0 0.0
        %1557 = vmatpush1.msra.mxu0 0.0
        %1558 = vmatprep.subr.mxu0 0.0
        %1559 = vmatpush1.msra.mxu0 0.0
        %1560 = vmatprep.subr.mxu0 0.0
        %1561 = vmatpush1.msra.mxu0 0.0
        %1562 = vmatprep.subr.mxu0 0.0
        %1563 = vmatpush1.msra.mxu0 0.0
        %1564 = vmatprep.subr.mxu0 0.0
        %1565 = vmatpush1.msra.mxu0 0.0
        %1566 = vmatprep.subr.mxu0 0.0
        %1567 = vmatpush1.msra.mxu0 0.0
        %1568 = vmatprep.subr.mxu0 0.0
        %1569 = vmatpush1.msra.mxu0 0.0
        %1570 = vmatprep.subr.mxu0 0.0
        %1571 = vmatpush1.msra.mxu0 0.0
        %1572 = vmatprep.subr.mxu0 0.0
        %1573 = vmatpush1.msra.mxu0 0.0
        %1574 = vmatprep.subr.mxu0 0.0
        %1575 = vmatpush1.msra.mxu0 0.0
        %1576 = vmatprep.subr.mxu0 0.0
        %1577 = vmatpush1.msra.mxu0 0.0
        %1578 = vmatprep.subr.mxu0 0.0
        %1579 = vmatpush1.msra.mxu0 0.0
        %1580 = vmatprep.subr.mxu0 0.0
        %1581 = vmatpush1.msra.mxu0 0.0
        %1582 = vmatprep.subr.mxu0 0.0
        %1583 = vmatpush1.msra.mxu0 0.0
        %1584 = vmatprep.subr.mxu0 0.0
        %1585 = vmatpush1.msra.mxu0 0.0
        %1586 = vmatprep.subr.mxu0 0.0
        %1587 = vmatpush1.msra.mxu0 0.0
        %1588 = vmatprep.subr.mxu0 0.0
        %1589 = vmatpush1.msra.mxu0 0.0
        %1590 = vmatprep.subr.mxu0 0.0
        %1591 = vmatpush1.msra.mxu0 0.0
        %1592 = vmatprep.subr.mxu0 0.0
        %1593 = vmatpush1.msra.mxu0 0.0
        %1594 = vmatprep.subr.mxu0 0.0
        %1595 = vmatpush1.msra.mxu0 0.0
        %1596 = vmatprep.subr.mxu0 0.0
        %1597 = vmatpush1.msra.mxu0 0.0
        %1598 = vmatprep.subr.mxu0 0.0
        %1599 = vmatpush1.msra.mxu0 0.0
        %1600 = vmatprep.subr.mxu0 0.0
        %1601 = vmatpush1.msra.mxu0 0.0
        %1602 = vmatprep.subr.mxu0 0.0
        %1603 = vmatpush1.msra.mxu0 0.0
        %1604 = vmatprep.subr.mxu0 0.0
        %1605 = vmatpush1.msra.mxu0 0.0
        %1606 = vmatprep.subr.mxu0 0.0
        %1607 = vmatpush1.msra.mxu0 0.0
        %1608 = vmatprep.subr.mxu0 0.0
        %1609 = vmatpush1.msra.mxu0 0.0
        %1610 = vmatprep.subr.mxu0 0.0
        %1611 = vmatpush1.msra.mxu0 0.0
        %1612 = vmatprep.mubr.f32.mxu0 0.0
        %1613 = vmatmul.mubr.f32.gmra.mrb[0].mxu0 %v1117
        %v1614 = vpop.f32.mrb[0].mxu0
        %v1615 = vadd.f32 0.0, %v1614
        %v1616 = vpop.f32.mrb[0].mxu0
        %1617 = vmatprep.mubr.f32.mxu0 0.0
        %1618 = vmatmul.mubr.f32.gmra.mrb[0].mxu0 %v1120
        %v1619 = vpop.f32.mrb[0].mxu0
        %v1620 = vadd.f32 0.0, %v1619
        %v1621 = vpop.f32.mrb[0].mxu0
        %1622 = vdwg.mxu0
        %s1623 = smul.u32 %s54, 128
        %s1624 = sld [smem:[#allocation2 + %s1623]]
        %v1625 = vstv %s1624
        %v1626 = vmul.f32 %v1625, %v1189
        %v1627 = vmul.f32 %v1625, %v1194
        %s1628 = sadd.s32 %s1623, 1
        %s1629 = sld [smem:[#allocation2 + %s1628]]
        %v1630 = vstv %s1629
        %v1631 = vmul.f32 %v1630, %v1402
        %v1632 = vmul.f32 %v1630, %v1407
        %v1633 = vadd.f32 %v1626, %v1631
        %v1634 = vadd.f32 %v1627, %v1632
        %s1635 = sadd.s32 %s1623, 2
        %s1636 = sld [smem:[#allocation2 + %s1635]]
        %v1637 = vstv %s1636
        %v1638 = vmul.f32 %v1637, %v1615
        %v1639 = vmul.f32 %v1637, %v1620
        %v1640 = vadd.f32 %v1633, %v1638
        %v1641 = vadd.f32 %v1634, %v1639
        %1642 = vst.msk [vmem:[%s972] sm:$0xff] %vm1070, %v1640
        %1643 = vst.msk [vmem:[%s972 + $0x8] sm:$0xff] %vm1070, %v1641
        %s1644 = sand.u32 %s447, 1
        %s1645 = scalar_lea.sflag [#allocation4], %s1644
        %s1646 = sand.u32 %s447, 1
        %s1647 = smul.addr %s1646, 16
        %s1648 = scalar_lea.vmem [#allocation27], %s1647
        // Predicated region
        $region141: #{my_model_forward.2} parent=79 // pred_check
          %p1649 = pneg %p457
        $region142: #{my_model_forward.2} parent=79 // pred_check_branch
          %1651 = sbr.rel (%p1649) target = $region144
        $region143: #{my_model_forward.2} parent=79 // pred_region
          %s1653 = ssub.s32 256, 256
          %1654 = vsyncadd %s1645, %s1653
          %s1655 = smul.addr %s54, 2
          %s1656 = smul.addr %s1655, 128
          %s1657 = scalar_lea.hbm %s15, %s1656
          %s1658 = sshll.u32 %s1648, 4
          %s1659 = int_to_ptr.vmem [resolvable:$true] %s1658
          %1664 = dma.vmem_to_hbm [thread:$0]  %s1659, 256, %s1657, %s1645, 128, 128, 8
        $region144: #{my_model_forward.2} parent=79 // pred_fallthru
          _
      $region80: #{my_model_forward.2} parent=5 // pred_fallthru
        _
      %p1665 = scmp.le.s32.totalorder 2, %s49
      // Predicated region
      $region145: #{my_model_forward.2} parent=5 // pred_check
        %p1666 = pneg %p1665
      $region146: #{my_model_forward.2} parent=5 // pred_check_branch
        %1668 = sbr.rel (%p1666) target = $region148
      $region147: #{my_model_forward.2} parent=5 // pred_region
        %s1669 = ssub.s32 %s49, 2
        // Predicated region
        $region149: #{my_model_forward.2} parent=147 // pred_check
          %p1670 = pneg %p463
        $region150: #{my_model_forward.2} parent=147 // pred_check_branch
          %1672 = sbr.rel (%p1670) target = $region152
        $region151: #{my_model_forward.2} parent=147 // pred_region
          %s1673 = sand.u32 %s448, 1
          %s1674 = scalar_lea.sflag [#allocation4], %s1673
          %s1675 = sand.u32 %s448, 1
          %s1676 = smul.addr %s1675, 16
          %s1677 = scalar_lea.vmem [#allocation27], %s1676
          %1678 = dma.done %s1674, 256
        $region152: #{my_model_forward.2} parent=147 // pred_fallthru
          _
      $region148: #{my_model_forward.2} parent=5 // pred_fallthru
        _
    $region6: #{my_model_forward.2} parent=1 // loop_footer
      %s53 = sadd.s32 1, %s49
    $region7: #{my_model_forward.2} parent=1 // loop_footer_branch
      %48 = sbr.rel target = $region3
    $region8: #{my_model_forward.2} parent=1 // loop_exit
      _
    %1679 = vsyncpa [#allocation3], 1
    %s1680 = scalar_lea.sflag [#allocation3], 1
    %1681 = vsyncpa %s1680, 1
    %1682 = vsyncpa [#allocation8], 1
    %s1683 = scalar_lea.sflag [#allocation8], 1
    %1684 = vsyncpa %s1683, 1
    %1685 = vsyncpa [#allocation11], 1
    %s1686 = scalar_lea.sflag [#allocation11], 1
    %1687 = vsyncpa %s1686, 1
    %1688 = vsyncpa [#allocation14], 1
    %s1689 = scalar_lea.sflag [#allocation14], 1
    %1690 = vsyncpa %s1689, 1
    %1691 = vsyncpa [#allocation17], 1
    %s1692 = scalar_lea.sflag [#allocation17], 1
    %1693 = vsyncpa %s1692, 1
    %1694 = vsyncpa [#allocation20], 1
    %s1695 = scalar_lea.sflag [#allocation20], 1
    %1696 = vsyncpa %s1695, 1
    %1697 = vsyncpa [#allocation23], 1
    %s1698 = scalar_lea.sflag [#allocation23], 1
    %1699 = vsyncpa %s1698, 1
    %1700 = vsyncpa [#allocation26], 1
    %s1701 = scalar_lea.sflag [#allocation26], 1
    %1702 = vsyncpa %s1701, 1
    %1703 = vsyncpa [#allocation4], 1
    %s1704 = scalar_lea.sflag [#allocation4], 1
    %1705 = vsyncpa %s1704, 1
    %1706 = vsyncpa [#allocation5], 1
    %s1707 = scalar_lea.sflag [#allocation5], 1
    %1708 = vsyncpa %s1707, 1

</llo_original>
